<compile_context>
chip_gen: v5e
topology: v5e:2x2
jax: 0.10.0
libtpu: 0.0.40
codegen_flags: <defaults>
</compile_context>

<pallas_src>
import jax
import jax.numpy as jnp
from jax.experimental import pallas as pl
from jax.experimental.pallas import tpu as pltpu


def _lstm_kernel(x_ref,        # (1, T*Bb, D)  time-major-flattened batch block
                 w_ih0_ref,    # (D, 4H)   layer-0 input->gates  (gate-prescaled)
                 w_hh0_ref,    # (H, 4H)   layer-0 hidden->gates (gate-prescaled)
                 b0_ref,       # (1, 4H)   layer-0 combined bias (gate-prescaled)
                 w_ih_r_ref,   # (L-1, H, 4H)
                 w_hh_r_ref,   # (L-1, H, 4H)
                 b_r_ref,      # (L-1, 1, 4H)
                 w_fc_ref,     # (1, H)    fc weight as a row vector
                 b_fc_ref,     # (1, 1)    fc bias, in SMEM
                 out_ref):     # (1, Bb, 1)
    Bb = out_ref.shape[1]
    T = x_ref.shape[1] // Bb
    H = w_hh0_ref.shape[0]
    n_rest = w_ih_r_ref.shape[0]

    x = x_ref[0]                                   # (T*Bb, D)

    # Hoisted layer-0 input projection for ALL timesteps: one MXU matmul,
    # result kept as an SSA value (8 vregs at T*Bb=64, 4H=128) — no scratch.
    gx0 = jnp.dot(x, w_ih0_ref[...],
                  preferred_element_type=jnp.float32) + b0_ref[...]
    # Per-step (Bb, 4H) gate tiles; each slice is one sublane-aligned vreg.
    gx = [gx0[t * Bb:(t + 1) * Bb, :] for t in range(T)]

    h = jnp.zeros((Bb, H), jnp.float32)
    for l in range(n_rest + 1):
        # Load W_hh once per layer; one SSA value reused by every unrolled
        # step -> Mosaic can keep it resident on the MXU across the 8 cells.
        w_hh = w_hh0_ref[...] if l == 0 else w_hh_r_ref[l - 1]
        has_next = l < n_rest
        if has_next:
            w_ih_nxt = w_ih_r_ref[l]               # (H, 4H), gate-prescaled
            b_nxt = b_r_ref[l]                     # (1, 4H), gate-prescaled
            gx_nxt = []

        h = jnp.zeros((Bb, H), jnp.float32)
        c = jnp.zeros((Bb, H), jnp.float32)

        # Fully unrolled recurrence; h/c live in vregs the whole time.
        for t in range(T):
            gates = gx[t] + jnp.dot(h, w_hh,
                                    preferred_element_type=jnp.float32)
            # i/f/o columns of the (pre-scaled) params carry 0.5*z, so a
            # single tanh over the whole (Bb, 4H) tile gives both the
            # sigmoid lanes (via 0.5*tanh+0.5) and the g-gate tanh lanes.
            th = jnp.tanh(gates)
            sg = 0.5 * th + 0.5
            i_g = sg[:, 0 * H:1 * H]
            f_g = sg[:, 1 * H:2 * H]
            g_g = th[:, 2 * H:3 * H]
            o_g = sg[:, 3 * H:4 * H]
            c = f_g * c + i_g * g_g
            h = o_g * jnp.tanh(c)
            if has_next:
                # Fused next-layer input projection: independent of this
                # layer's remaining recurrence, so it's hidden under the
                # serial chain (MXU is otherwise idle).
                gx_nxt.append(jnp.dot(h, w_ih_nxt,
                                      preferred_element_type=jnp.float32)
                              + b_nxt)
        if has_next:
            gx = gx_nxt

    # fc on the last timestep of the top layer: broadcast-mul + lane reduce
    # instead of a 1-column MXU matmul; scalar bias from SMEM.
    out_ref[0] = (jnp.sum(h * w_fc_ref[...], axis=1, keepdims=True)
                  + b_fc_ref[0, 0])


def prepare_params(params):
    """One-time kernel-layout prep: pre-scale i/f/o gate columns by 0.5 and
    reshape the fc weight to a row vector. Done OUTSIDE the kernel, once."""
    H = params["w_hh0"].shape[0]
    col = jnp.arange(4 * H)
    is_g = (col >= 2 * H) & (col < 3 * H)
    scale = jnp.where(is_g, 1.0, 0.5).astype(jnp.float32)   # (4H,)
    return {
        "w_ih0": params["w_ih0"] * scale,
        "w_hh0": params["w_hh0"] * scale,
        "b0": params["b0"] * scale,
        "w_ih_r": params["w_ih_r"] * scale,
        "w_hh_r": params["w_hh_r"] * scale,
        "b_r": params["b_r"] * scale,
        "w_fc": params["w_fc"].reshape(1, H),
        "b_fc": params["b_fc"],
    }


def power_lstm_forward(x, kparams, *, block_b=8):
    """x: (B, T, D) float32, batch_first like PyTorch. kparams from
    prepare_params(). Returns (B, 1)."""
    B, T, D = x.shape
    H = kparams["w_hh0"].shape[0]
    assert B % block_b == 0, "batch must be a multiple of the 8-row block"
    nb = B // block_b

    # (B, T, D) -> (nb, T*block_b, D), time-major within each batch block
    # (row t*block_b + b  <->  (timestep t, batch row b of this block)).
    x_tm = (jnp.transpose(x, (1, 0, 2))            # (T, B, D)
            .reshape(T, nb, block_b, D)
            .transpose(1, 0, 2, 3)                 # (nb, T, block_b, D)
            .reshape(nb, T * block_b, D))

    def full_vmem(a):
        return pl.BlockSpec(a.shape, lambda j, nd=a.ndim: (0,) * nd,
                            memory_space=pltpu.MemorySpace.VMEM)

    out = pl.pallas_call(
        _lstm_kernel,
        out_shape=jax.ShapeDtypeStruct((nb, block_b, 1), jnp.float32),
        grid=(nb,),
        in_specs=[
            pl.BlockSpec((1, T * block_b, D), lambda j: (j, 0, 0)),
            full_vmem(kparams["w_ih0"]),
            full_vmem(kparams["w_hh0"]),
            full_vmem(kparams["b0"]),
            full_vmem(kparams["w_ih_r"]),
            full_vmem(kparams["w_hh_r"]),
            full_vmem(kparams["b_r"]),
            full_vmem(kparams["w_fc"]),
            pl.BlockSpec((1, 1), lambda j: (0, 0),
                         memory_space=pltpu.MemorySpace.SMEM),
        ],
        out_specs=pl.BlockSpec((1, block_b, 1), lambda j: (j, 0, 0)),
        compiler_params=pltpu.CompilerParams(
            dimension_semantics=("parallel",)),
    )(x_tm,
      kparams["w_ih0"], kparams["w_hh0"], kparams["b0"],
      kparams["w_ih_r"], kparams["w_hh_r"], kparams["b_r"],
      kparams["w_fc"], kparams["b_fc"])
    return out.reshape(B, 1)


def power_lstm_ref(x, params):
    """Pure-JAX reference with torch.nn.LSTM semantics (for verification)."""
    B, T, _ = x.shape
    H = params["w_hh0"].shape[0]

    def run_layer(inp, w_ih, w_hh, b):
        h = jnp.zeros((B, H), jnp.float32)
        c = jnp.zeros((B, H), jnp.float32)
        outs = []
        for t in range(T):
            gates = inp[:, t, :] @ w_ih + h @ w_hh + b
            i = jax.nn.sigmoid(gates[:, :H])
            f = jax.nn.sigmoid(gates[:, H:2 * H])
            g = jnp.tanh(gates[:, 2 * H:3 * H])
            o = jax.nn.sigmoid(gates[:, 3 * H:])
            c = f * c + i * g
            h = o * jnp.tanh(c)
            outs.append(h)
        return jnp.stack(outs, axis=1)

    y = run_layer(x, params["w_ih0"], params["w_hh0"], params["b0"])
    for l in range(params["w_ih_r"].shape[0]):
        y = run_layer(y, params["w_ih_r"][l], params["w_hh_r"][l],
                      params["b_r"][l])
    return y[:, -1, :] @ params["w_fc"] + params["b_fc"]


def init_params(key, input_size, hidden_size, num_layers):
    """Deterministic synthetic params matching torch.nn.LSTM / Linear shapes
    (torch weights are (4H, in); stored transposed as (in, 4H), gate order
    i, f, g, o)."""
    H = hidden_size
    scale = 1.0 / jnp.sqrt(jnp.float32(H))
    keys = jax.random.split(key, 8)

    def u(k, shape):
        return jax.random.uniform(k, shape, jnp.float32, -scale, scale)

    params = {
        "w_ih0": u(keys[0], (input_size, 4 * H)),
        "w_hh0": u(keys[1], (H, 4 * H)),
        # combined bias b_ih + b_hh (torch keeps two separate bias vectors)
        "b0": u(keys[2], (1, 4 * H)) + u(keys[3], (1, 4 * H)),
        "w_ih_r": u(keys[4], (num_layers - 1, H, 4 * H)),
        "w_hh_r": u(keys[5], (num_layers - 1, H, 4 * H)),
        "b_r": u(keys[6], (num_layers - 1, 1, 4 * H))
               + u(keys[7], (num_layers - 1, 1, 4 * H)),
    }
    kfc_w, kfc_b = jax.random.split(jax.random.fold_in(key, 123))
    params["w_fc"] = jax.random.uniform(kfc_w, (H, 1), jnp.float32, -scale, scale)
    params["b_fc"] = jax.random.uniform(kfc_b, (1, 1), jnp.float32, -scale, scale)
    return params


if __name__ == "__main__":
    B, T, D = 8, 8, 8          # batch, seq_len, input_size
    H, L = 32, 3               # hidden_size, num_layers

    key = jax.random.PRNGKey(0)
    kx, kp = jax.random.split(key)
    x = jax.random.normal(kx, (B, T, D), jnp.float32)
    params = init_params(kp, D, H, L)
    kparams = prepare_params(params)          # one-time prep, outside kernel

    out = power_lstm_forward(x, kparams)
    out = jax.block_until_ready(out)

    ref = power_lstm_ref(x, params)
    assert out.shape == (B, 1)
    assert jnp.allclose(out, ref, atol=1e-5, rtol=1e-5), (out, ref)

    print("KERNEL_OK")
</pallas_src>

<mosaic_0001>
module attributes {stable_mosaic.version = 11 : i64} {
  func.func @_lstm_kernel(%arg0: i32, %arg1: memref<1x64x8xf32, #tpu.memory_space<vmem>>, %arg2: memref<8x128xf32, #tpu.memory_space<vmem>>, %arg3: memref<32x128xf32, #tpu.memory_space<vmem>>, %arg4: memref<1x128xf32, #tpu.memory_space<vmem>>, %arg5: memref<2x32x128xf32, #tpu.memory_space<vmem>>, %arg6: memref<2x32x128xf32, #tpu.memory_space<vmem>>, %arg7: memref<2x1x128xf32, #tpu.memory_space<vmem>>, %arg8: memref<1x32xf32, #tpu.memory_space<vmem>>, %arg9: memref<1x1xf32, #tpu.memory_space<smem>>, %arg10: memref<1x8x1xf32, #tpu.memory_space<vmem>>) attributes {dimension_semantics = [#tpu.dimension_semantics<parallel>], iteration_bounds = array<i64: 1>, scalar_prefetch = 0 : i64, scratch_operands = 0 : i64, tpu.core_type = #tpu.core_type<tc>, window_params = [{transform_indices = @transform_0, window_bounds = array<i64: 1, 64, 8>}, {pipeline_mode = #tpu.pipeline_mode<synchronous>, transform_indices = @transform_1, window_bounds = array<i64: 8, 128>}, {pipeline_mode = #tpu.pipeline_mode<synchronous>, transform_indices = @transform_2, window_bounds = array<i64: 32, 128>}, {pipeline_mode = #tpu.pipeline_mode<synchronous>, transform_indices = @transform_3, window_bounds = array<i64: 1, 128>}, {pipeline_mode = #tpu.pipeline_mode<synchronous>, transform_indices = @transform_4, window_bounds = array<i64: 2, 32, 128>}, {pipeline_mode = #tpu.pipeline_mode<synchronous>, transform_indices = @transform_5, window_bounds = array<i64: 2, 32, 128>}, {pipeline_mode = #tpu.pipeline_mode<synchronous>, transform_indices = @transform_6, window_bounds = array<i64: 2, 1, 128>}, {pipeline_mode = #tpu.pipeline_mode<synchronous>, transform_indices = @transform_7, window_bounds = array<i64: 1, 32>}, {transform_indices = @transform_8, window_bounds = array<i64: 1, 1>}, {transform_indices = @transform_9, window_bounds = array<i64: 1, 8, 1>}]} {
    %c0 = arith.constant 0 : index
    %c0_0 = arith.constant 0 : index
    %c0_1 = arith.constant 0 : index
    %0 = vector.load %arg1[%c0, %c0_0, %c0_1] : memref<1x64x8xf32, #tpu.memory_space<vmem>>, vector<1x64x8xf32>
    %1 = vector.shape_cast %0 : vector<1x64x8xf32> to vector<64x8xf32>
    %c0_2 = arith.constant 0 : index
    %c0_3 = arith.constant 0 : index
    %2 = vector.load %arg2[%c0_2, %c0_3] : memref<8x128xf32, #tpu.memory_space<vmem>>, vector<8x128xf32>
    %cst = arith.constant dense<0.000000e+00> : vector<64x128xf32>
    %3 = tpu.matmul %1, %2, %cst {dimension_numbers = #tpu.dot_dimension_numbers<[1], [0], [0], [1], [0, 0, 1, 1], [], []>} : vector<64x8xf32>, vector<8x128xf32>, vector<64x128xf32> -> vector<64x128xf32>
    %c0_4 = arith.constant 0 : index
    %c0_5 = arith.constant 0 : index
    %4 = vector.load %arg4[%c0_4, %c0_5] : memref<1x128xf32, #tpu.memory_space<vmem>>, vector<1x128xf32>
    %5 = vector.broadcast %4 : vector<1x128xf32> to vector<64x128xf32>
    %6 = arith.addf %3, %5 : vector<64x128xf32>
    %7 = vector.extract_strided_slice %6 {offsets = [0, 0], sizes = [8, 128], strides = [1, 1]} : vector<64x128xf32> to vector<8x128xf32>
    %8 = vector.extract_strided_slice %6 {offsets = [8, 0], sizes = [8, 128], strides = [1, 1]} : vector<64x128xf32> to vector<8x128xf32>
    %9 = vector.extract_strided_slice %6 {offsets = [16, 0], sizes = [8, 128], strides = [1, 1]} : vector<64x128xf32> to vector<8x128xf32>
    %10 = vector.extract_strided_slice %6 {offsets = [24, 0], sizes = [8, 128], strides = [1, 1]} : vector<64x128xf32> to vector<8x128xf32>
    %11 = vector.extract_strided_slice %6 {offsets = [32, 0], sizes = [8, 128], strides = [1, 1]} : vector<64x128xf32> to vector<8x128xf32>
    %12 = vector.extract_strided_slice %6 {offsets = [40, 0], sizes = [8, 128], strides = [1, 1]} : vector<64x128xf32> to vector<8x128xf32>
    %13 = vector.extract_strided_slice %6 {offsets = [48, 0], sizes = [8, 128], strides = [1, 1]} : vector<64x128xf32> to vector<8x128xf32>
    %14 = vector.extract_strided_slice %6 {offsets = [56, 0], sizes = [8, 128], strides = [1, 1]} : vector<64x128xf32> to vector<8x128xf32>
    %c0_6 = arith.constant 0 : index
    %c0_7 = arith.constant 0 : index
    %15 = vector.load %arg3[%c0_6, %c0_7] : memref<32x128xf32, #tpu.memory_space<vmem>>, vector<32x128xf32>
    %c0_8 = arith.constant 0 : index
    %c0_9 = arith.constant 0 : index
    %c0_10 = arith.constant 0 : index
    %16 = vector.load %arg5[%c0_8, %c0_9, %c0_10] : memref<2x32x128xf32, #tpu.memory_space<vmem>>, vector<1x32x128xf32>
    %17 = vector.shape_cast %16 : vector<1x32x128xf32> to vector<32x128xf32>
    %c0_11 = arith.constant 0 : index
    %c0_12 = arith.constant 0 : index
    %c0_13 = arith.constant 0 : index
    %18 = vector.load %arg7[%c0_11, %c0_12, %c0_13] : memref<2x1x128xf32, #tpu.memory_space<vmem>>, vector<1x1x128xf32>
    %19 = vector.shape_cast %18 : vector<1x1x128xf32> to vector<1x128xf32>
    %cst_14 = arith.constant 0.000000e+00 : f32
    %20 = vector.broadcast %cst_14 : f32 to vector<8x32xf32>
    %cst_15 = arith.constant 0.000000e+00 : f32
    %21 = vector.broadcast %cst_15 : f32 to vector<8x32xf32>
    %cst_16 = arith.constant dense<0.000000e+00> : vector<8x128xf32>
    %22 = tpu.matmul %20, %15, %cst_16 {dimension_numbers = #tpu.dot_dimension_numbers<[1], [0], [0], [1], [0, 0, 1, 1], [], []>} : vector<8x32xf32>, vector<32x128xf32>, vector<8x128xf32> -> vector<8x128xf32>
    %23 = arith.addf %7, %22 : vector<8x128xf32>
    %24 = math.tanh %23 : vector<8x128xf32>
    %cst_17 = arith.constant 5.000000e-01 : f32
    %25 = vector.broadcast %cst_17 : f32 to vector<8x128xf32>
    %26 = arith.mulf %25, %24 : vector<8x128xf32>
    %cst_18 = arith.constant 5.000000e-01 : f32
    %27 = vector.broadcast %cst_18 : f32 to vector<8x128xf32>
    %28 = arith.addf %26, %27 : vector<8x128xf32>
    %29 = vector.extract_strided_slice %28 {offsets = [0, 0], sizes = [8, 32], strides = [1, 1]} : vector<8x128xf32> to vector<8x32xf32>
    %30 = vector.extract_strided_slice %28 {offsets = [0, 32], sizes = [8, 32], strides = [1, 1]} : vector<8x128xf32> to vector<8x32xf32>
    %31 = vector.extract_strided_slice %24 {offsets = [0, 64], sizes = [8, 32], strides = [1, 1]} : vector<8x128xf32> to vector<8x32xf32>
    %32 = vector.extract_strided_slice %28 {offsets = [0, 96], sizes = [8, 32], strides = [1, 1]} : vector<8x128xf32> to vector<8x32xf32>
    %33 = arith.mulf %30, %21 : vector<8x32xf32>
    %34 = arith.mulf %29, %31 : vector<8x32xf32>
    %35 = arith.addf %33, %34 : vector<8x32xf32>
    %36 = math.tanh %35 : vector<8x32xf32>
    %37 = arith.mulf %32, %36 : vector<8x32xf32>
    %cst_19 = arith.constant dense<0.000000e+00> : vector<8x128xf32>
    %38 = tpu.matmul %37, %17, %cst_19 {dimension_numbers = #tpu.dot_dimension_numbers<[1], [0], [0], [1], [0, 0, 1, 1], [], []>} : vector<8x32xf32>, vector<32x128xf32>, vector<8x128xf32> -> vector<8x128xf32>
    %39 = vector.broadcast %19 : vector<1x128xf32> to vector<8x128xf32>
    %40 = arith.addf %38, %39 : vector<8x128xf32>
    %cst_20 = arith.constant dense<0.000000e+00> : vector<8x128xf32>
    %41 = tpu.matmul %37, %15, %cst_20 {dimension_numbers = #tpu.dot_dimension_numbers<[1], [0], [0], [1], [0, 0, 1, 1], [], []>} : vector<8x32xf32>, vector<32x128xf32>, vector<8x128xf32> -> vector<8x128xf32>
    %42 = arith.addf %8, %41 : vector<8x128xf32>
    %43 = math.tanh %42 : vector<8x128xf32>
    %cst_21 = arith.constant 5.000000e-01 : f32
    %44 = vector.broadcast %cst_21 : f32 to vector<8x128xf32>
    %45 = arith.mulf %44, %43 : vector<8x128xf32>
    %cst_22 = arith.constant 5.000000e-01 : f32
    %46 = vector.broadcast %cst_22 : f32 to vector<8x128xf32>
    %47 = arith.addf %45, %46 : vector<8x128xf32>
    %48 = vector.extract_strided_slice %47 {offsets = [0, 0], sizes = [8, 32], strides = [1, 1]} : vector<8x128xf32> to vector<8x32xf32>
    %49 = vector.extract_strided_slice %47 {offsets = [0, 32], sizes = [8, 32], strides = [1, 1]} : vector<8x128xf32> to vector<8x32xf32>
    %50 = vector.extract_strided_slice %43 {offsets = [0, 64], sizes = [8, 32], strides = [1, 1]} : vector<8x128xf32> to vector<8x32xf32>
    %51 = vector.extract_strided_slice %47 {offsets = [0, 96], sizes = [8, 32], strides = [1, 1]} : vector<8x128xf32> to vector<8x32xf32>
    %52 = arith.mulf %49, %35 : vector<8x32xf32>
    %53 = arith.mulf %48, %50 : vector<8x32xf32>
    %54 = arith.addf %52, %53 : vector<8x32xf32>
    %55 = math.tanh %54 : vector<8x32xf32>
    %56 = arith.mulf %51, %55 : vector<8x32xf32>
    %cst_23 = arith.constant dense<0.000000e+00> : vector<8x128xf32>
    %57 = tpu.matmul %56, %17, %cst_23 {dimension_numbers = #tpu.dot_dimension_numbers<[1], [0], [0], [1], [0, 0, 1, 1], [], []>} : vector<8x32xf32>, vector<32x128xf32>, vector<8x128xf32> -> vector<8x128xf32>
    %58 = vector.broadcast %19 : vector<1x128xf32> to vector<8x128xf32>
    %59 = arith.addf %57, %58 : vector<8x128xf32>
    %cst_24 = arith.constant dense<0.000000e+00> : vector<8x128xf32>
    %60 = tpu.matmul %56, %15, %cst_24 {dimension_numbers = #tpu.dot_dimension_numbers<[1], [0], [0], [1], [0, 0, 1, 1], [], []>} : vector<8x32xf32>, vector<32x128xf32>, vector<8x128xf32> -> vector<8x128xf32>
    %61 = arith.addf %9, %60 : vector<8x128xf32>
    %62 = math.tanh %61 : vector<8x128xf32>
    %cst_25 = arith.constant 5.000000e-01 : f32
    %63 = vector.broadcast %cst_25 : f32 to vector<8x128xf32>
    %64 = arith.mulf %63, %62 : vector<8x128xf32>
    %cst_26 = arith.constant 5.000000e-01 : f32
    %65 = vector.broadcast %cst_26 : f32 to vector<8x128xf32>
    %66 = arith.addf %64, %65 : vector<8x128xf32>
    %67 = vector.extract_strided_slice %66 {offsets = [0, 0], sizes = [8, 32], strides = [1, 1]} : vector<8x128xf32> to vector<8x32xf32>
    %68 = vector.extract_strided_slice %66 {offsets = [0, 32], sizes = [8, 32], strides = [1, 1]} : vector<8x128xf32> to vector<8x32xf32>
    %69 = vector.extract_strided_slice %62 {offsets = [0, 64], sizes = [8, 32], strides = [1, 1]} : vector<8x128xf32> to vector<8x32xf32>
    %70 = vector.extract_strided_slice %66 {offsets = [0, 96], sizes = [8, 32], strides = [1, 1]} : vector<8x128xf32> to vector<8x32xf32>
    %71 = arith.mulf %68, %54 : vector<8x32xf32>
    %72 = arith.mulf %67, %69 : vector<8x32xf32>
    %73 = arith.addf %71, %72 : vector<8x32xf32>
    %74 = math.tanh %73 : vector<8x32xf32>
    %75 = arith.mulf %70, %74 : vector<8x32xf32>
    %cst_27 = arith.constant dense<0.000000e+00> : vector<8x128xf32>
    %76 = tpu.matmul %75, %17, %cst_27 {dimension_numbers = #tpu.dot_dimension_numbers<[1], [0], [0], [1], [0, 0, 1, 1], [], []>} : vector<8x32xf32>, vector<32x128xf32>, vector<8x128xf32> -> vector<8x128xf32>
    %77 = vector.broadcast %19 : vector<1x128xf32> to vector<8x128xf32>
    %78 = arith.addf %76, %77 : vector<8x128xf32>
    %cst_28 = arith.constant dense<0.000000e+00> : vector<8x128xf32>
    %79 = tpu.matmul %75, %15, %cst_28 {dimension_numbers = #tpu.dot_dimension_numbers<[1], [0], [0], [1], [0, 0, 1, 1], [], []>} : vector<8x32xf32>, vector<32x128xf32>, vector<8x128xf32> -> vector<8x128xf32>
    %80 = arith.addf %10, %79 : vector<8x128xf32>
    %81 = math.tanh %80 : vector<8x128xf32>
    %cst_29 = arith.constant 5.000000e-01 : f32
    %82 = vector.broadcast %cst_29 : f32 to vector<8x128xf32>
    %83 = arith.mulf %82, %81 : vector<8x128xf32>
    %cst_30 = arith.constant 5.000000e-01 : f32
    %84 = vector.broadcast %cst_30 : f32 to vector<8x128xf32>
    %85 = arith.addf %83, %84 : vector<8x128xf32>
    %86 = vector.extract_strided_slice %85 {offsets = [0, 0], sizes = [8, 32], strides = [1, 1]} : vector<8x128xf32> to vector<8x32xf32>
    %87 = vector.extract_strided_slice %85 {offsets = [0, 32], sizes = [8, 32], strides = [1, 1]} : vector<8x128xf32> to vector<8x32xf32>
    %88 = vector.extract_strided_slice %81 {offsets = [0, 64], sizes = [8, 32], strides = [1, 1]} : vector<8x128xf32> to vector<8x32xf32>
    %89 = vector.extract_strided_slice %85 {offsets = [0, 96], sizes = [8, 32], strides = [1, 1]} : vector<8x128xf32> to vector<8x32xf32>
    %90 = arith.mulf %87, %73 : vector<8x32xf32>
    %91 = arith.mulf %86, %88 : vector<8x32xf32>
    %92 = arith.addf %90, %91 : vector<8x32xf32>
    %93 = math.tanh %92 : vector<8x32xf32>
    %94 = arith.mulf %89, %93 : vector<8x32xf32>
    %cst_31 = arith.constant dense<0.000000e+00> : vector<8x128xf32>
    %95 = tpu.matmul %94, %17, %cst_31 {dimension_numbers = #tpu.dot_dimension_numbers<[1], [0], [0], [1], [0, 0, 1, 1], [], []>} : vector<8x32xf32>, vector<32x128xf32>, vector<8x128xf32> -> vector<8x128xf32>
    %96 = vector.broadcast %19 : vector<1x128xf32> to vector<8x128xf32>
    %97 = arith.addf %95, %96 : vector<8x128xf32>
    %cst_32 = arith.constant dense<0.000000e+00> : vector<8x128xf32>
    %98 = tpu.matmul %94, %15, %cst_32 {dimension_numbers = #tpu.dot_dimension_numbers<[1], [0], [0], [1], [0, 0, 1, 1], [], []>} : vector<8x32xf32>, vector<32x128xf32>, vector<8x128xf32> -> vector<8x128xf32>
    %99 = arith.addf %11, %98 : vector<8x128xf32>
    %100 = math.tanh %99 : vector<8x128xf32>
    %cst_33 = arith.constant 5.000000e-01 : f32
    %101 = vector.broadcast %cst_33 : f32 to vector<8x128xf32>
    %102 = arith.mulf %101, %100 : vector<8x128xf32>
    %cst_34 = arith.constant 5.000000e-01 : f32
    %103 = vector.broadcast %cst_34 : f32 to vector<8x128xf32>
    %104 = arith.addf %102, %103 : vector<8x128xf32>
    %105 = vector.extract_strided_slice %104 {offsets = [0, 0], sizes = [8, 32], strides = [1, 1]} : vector<8x128xf32> to vector<8x32xf32>
    %106 = vector.extract_strided_slice %104 {offsets = [0, 32], sizes = [8, 32], strides = [1, 1]} : vector<8x128xf32> to vector<8x32xf32>
    %107 = vector.extract_strided_slice %100 {offsets = [0, 64], sizes = [8, 32], strides = [1, 1]} : vector<8x128xf32> to vector<8x32xf32>
    %108 = vector.extract_strided_slice %104 {offsets = [0, 96], sizes = [8, 32], strides = [1, 1]} : vector<8x128xf32> to vector<8x32xf32>
    %109 = arith.mulf %106, %92 : vector<8x32xf32>
    %110 = arith.mulf %105, %107 : vector<8x32xf32>
    %111 = arith.addf %109, %110 : vector<8x32xf32>
    %112 = math.tanh %111 : vector<8x32xf32>
    %113 = arith.mulf %108, %112 : vector<8x32xf32>
    %cst_35 = arith.constant dense<0.000000e+00> : vector<8x128xf32>
    %114 = tpu.matmul %113, %17, %cst_35 {dimension_numbers = #tpu.dot_dimension_numbers<[1], [0], [0], [1], [0, 0, 1, 1], [], []>} : vector<8x32xf32>, vector<32x128xf32>, vector<8x128xf32> -> vector<8x128xf32>
    %115 = vector.broadcast %19 : vector<1x128xf32> to vector<8x128xf32>
    %116 = arith.addf %114, %115 : vector<8x128xf32>
    %cst_36 = arith.constant dense<0.000000e+00> : vector<8x128xf32>
    %117 = tpu.matmul %113, %15, %cst_36 {dimension_numbers = #tpu.dot_dimension_numbers<[1], [0], [0], [1], [0, 0, 1, 1], [], []>} : vector<8x32xf32>, vector<32x128xf32>, vector<8x128xf32> -> vector<8x128xf32>
    %118 = arith.addf %12, %117 : vector<8x128xf32>
    %119 = math.tanh %118 : vector<8x128xf32>
    %cst_37 = arith.constant 5.000000e-01 : f32
    %120 = vector.broadcast %cst_37 : f32 to vector<8x128xf32>
    %121 = arith.mulf %120, %119 : vector<8x128xf32>
    %cst_38 = arith.constant 5.000000e-01 : f32
    %122 = vector.broadcast %cst_38 : f32 to vector<8x128xf32>
    %123 = arith.addf %121, %122 : vector<8x128xf32>
    %124 = vector.extract_strided_slice %123 {offsets = [0, 0], sizes = [8, 32], strides = [1, 1]} : vector<8x128xf32> to vector<8x32xf32>
    %125 = vector.extract_strided_slice %123 {offsets = [0, 32], sizes = [8, 32], strides = [1, 1]} : vector<8x128xf32> to vector<8x32xf32>
    %126 = vector.extract_strided_slice %119 {offsets = [0, 64], sizes = [8, 32], strides = [1, 1]} : vector<8x128xf32> to vector<8x32xf32>
    %127 = vector.extract_strided_slice %123 {offsets = [0, 96], sizes = [8, 32], strides = [1, 1]} : vector<8x128xf32> to vector<8x32xf32>
    %128 = arith.mulf %125, %111 : vector<8x32xf32>
    %129 = arith.mulf %124, %126 : vector<8x32xf32>
    %130 = arith.addf %128, %129 : vector<8x32xf32>
    %131 = math.tanh %130 : vector<8x32xf32>
    %132 = arith.mulf %127, %131 : vector<8x32xf32>
    %cst_39 = arith.constant dense<0.000000e+00> : vector<8x128xf32>
    %133 = tpu.matmul %132, %17, %cst_39 {dimension_numbers = #tpu.dot_dimension_numbers<[1], [0], [0], [1], [0, 0, 1, 1], [], []>} : vector<8x32xf32>, vector<32x128xf32>, vector<8x128xf32> -> vector<8x128xf32>
    %134 = vector.broadcast %19 : vector<1x128xf32> to vector<8x128xf32>
    %135 = arith.addf %133, %134 : vector<8x128xf32>
    %cst_40 = arith.constant dense<0.000000e+00> : vector<8x128xf32>
    %136 = tpu.matmul %132, %15, %cst_40 {dimension_numbers = #tpu.dot_dimension_numbers<[1], [0], [0], [1], [0, 0, 1, 1], [], []>} : vector<8x32xf32>, vector<32x128xf32>, vector<8x128xf32> -> vector<8x128xf32>
    %137 = arith.addf %13, %136 : vector<8x128xf32>
    %138 = math.tanh %137 : vector<8x128xf32>
    %cst_41 = arith.constant 5.000000e-01 : f32
    %139 = vector.broadcast %cst_41 : f32 to vector<8x128xf32>
    %140 = arith.mulf %139, %138 : vector<8x128xf32>
    %cst_42 = arith.constant 5.000000e-01 : f32
    %141 = vector.broadcast %cst_42 : f32 to vector<8x128xf32>
    %142 = arith.addf %140, %141 : vector<8x128xf32>
    %143 = vector.extract_strided_slice %142 {offsets = [0, 0], sizes = [8, 32], strides = [1, 1]} : vector<8x128xf32> to vector<8x32xf32>
    %144 = vector.extract_strided_slice %142 {offsets = [0, 32], sizes = [8, 32], strides = [1, 1]} : vector<8x128xf32> to vector<8x32xf32>
    %145 = vector.extract_strided_slice %138 {offsets = [0, 64], sizes = [8, 32], strides = [1, 1]} : vector<8x128xf32> to vector<8x32xf32>
    %146 = vector.extract_strided_slice %142 {offsets = [0, 96], sizes = [8, 32], strides = [1, 1]} : vector<8x128xf32> to vector<8x32xf32>
    %147 = arith.mulf %144, %130 : vector<8x32xf32>
    %148 = arith.mulf %143, %145 : vector<8x32xf32>
    %149 = arith.addf %147, %148 : vector<8x32xf32>
    %150 = math.tanh %149 : vector<8x32xf32>
    %151 = arith.mulf %146, %150 : vector<8x32xf32>
    %cst_43 = arith.constant dense<0.000000e+00> : vector<8x128xf32>
    %152 = tpu.matmul %151, %17, %cst_43 {dimension_numbers = #tpu.dot_dimension_numbers<[1], [0], [0], [1], [0, 0, 1, 1], [], []>} : vector<8x32xf32>, vector<32x128xf32>, vector<8x128xf32> -> vector<8x128xf32>
    %153 = vector.broadcast %19 : vector<1x128xf32> to vector<8x128xf32>
    %154 = arith.addf %152, %153 : vector<8x128xf32>
    %cst_44 = arith.constant dense<0.000000e+00> : vector<8x128xf32>
    %155 = tpu.matmul %151, %15, %cst_44 {dimension_numbers = #tpu.dot_dimension_numbers<[1], [0], [0], [1], [0, 0, 1, 1], [], []>} : vector<8x32xf32>, vector<32x128xf32>, vector<8x128xf32> -> vector<8x128xf32>
    %156 = arith.addf %14, %155 : vector<8x128xf32>
    %157 = math.tanh %156 : vector<8x128xf32>
    %cst_45 = arith.constant 5.000000e-01 : f32
    %158 = vector.broadcast %cst_45 : f32 to vector<8x128xf32>
    %159 = arith.mulf %158, %157 : vector<8x128xf32>
    %cst_46 = arith.constant 5.000000e-01 : f32
    %160 = vector.broadcast %cst_46 : f32 to vector<8x128xf32>
    %161 = arith.addf %159, %160 : vector<8x128xf32>
    %162 = vector.extract_strided_slice %161 {offsets = [0, 0], sizes = [8, 32], strides = [1, 1]} : vector<8x128xf32> to vector<8x32xf32>
    %163 = vector.extract_strided_slice %161 {offsets = [0, 32], sizes = [8, 32], strides = [1, 1]} : vector<8x128xf32> to vector<8x32xf32>
    %164 = vector.extract_strided_slice %157 {offsets = [0, 64], sizes = [8, 32], strides = [1, 1]} : vector<8x128xf32> to vector<8x32xf32>
    %165 = vector.extract_strided_slice %161 {offsets = [0, 96], sizes = [8, 32], strides = [1, 1]} : vector<8x128xf32> to vector<8x32xf32>
    %166 = arith.mulf %163, %149 : vector<8x32xf32>
    %167 = arith.mulf %162, %164 : vector<8x32xf32>
    %168 = arith.addf %166, %167 : vector<8x32xf32>
    %169 = math.tanh %168 : vector<8x32xf32>
    %170 = arith.mulf %165, %169 : vector<8x32xf32>
    %cst_47 = arith.constant dense<0.000000e+00> : vector<8x128xf32>
    %171 = tpu.matmul %170, %17, %cst_47 {dimension_numbers = #tpu.dot_dimension_numbers<[1], [0], [0], [1], [0, 0, 1, 1], [], []>} : vector<8x32xf32>, vector<32x128xf32>, vector<8x128xf32> -> vector<8x128xf32>
    %172 = vector.broadcast %19 : vector<1x128xf32> to vector<8x128xf32>
    %173 = arith.addf %171, %172 : vector<8x128xf32>
    %c0_48 = arith.constant 0 : index
    %c0_49 = arith.constant 0 : index
    %c0_50 = arith.constant 0 : index
    %174 = vector.load %arg6[%c0_48, %c0_49, %c0_50] : memref<2x32x128xf32, #tpu.memory_space<vmem>>, vector<1x32x128xf32>
    %175 = vector.shape_cast %174 : vector<1x32x128xf32> to vector<32x128xf32>
    %c1 = arith.constant 1 : index
    %c0_51 = arith.constant 0 : index
    %c0_52 = arith.constant 0 : index
    %176 = vector.load %arg5[%c1, %c0_51, %c0_52] : memref<2x32x128xf32, #tpu.memory_space<vmem>>, vector<1x32x128xf32>
    %177 = vector.shape_cast %176 : vector<1x32x128xf32> to vector<32x128xf32>
    %c1_53 = arith.constant 1 : index
    %c0_54 = arith.constant 0 : index
    %c0_55 = arith.constant 0 : index
    %178 = vector.load %arg7[%c1_53, %c0_54, %c0_55] : memref<2x1x128xf32, #tpu.memory_space<vmem>>, vector<1x1x128xf32>
    %179 = vector.shape_cast %178 : vector<1x1x128xf32> to vector<1x128xf32>
    %cst_56 = arith.constant 0.000000e+00 : f32
    %180 = vector.broadcast %cst_56 : f32 to vector<8x32xf32>
    %cst_57 = arith.constant 0.000000e+00 : f32
    %181 = vector.broadcast %cst_57 : f32 to vector<8x32xf32>
    %cst_58 = arith.constant dense<0.000000e+00> : vector<8x128xf32>
    %182 = tpu.matmul %180, %175, %cst_58 {dimension_numbers = #tpu.dot_dimension_numbers<[1], [0], [0], [1], [0, 0, 1, 1], [], []>} : vector<8x32xf32>, vector<32x128xf32>, vector<8x128xf32> -> vector<8x128xf32>
    %183 = arith.addf %40, %182 : vector<8x128xf32>
    %184 = math.tanh %183 : vector<8x128xf32>
    %cst_59 = arith.constant 5.000000e-01 : f32
    %185 = vector.broadcast %cst_59 : f32 to vector<8x128xf32>
    %186 = arith.mulf %185, %184 : vector<8x128xf32>
    %cst_60 = arith.constant 5.000000e-01 : f32
    %187 = vector.broadcast %cst_60 : f32 to vector<8x128xf32>
    %188 = arith.addf %186, %187 : vector<8x128xf32>
    %189 = vector.extract_strided_slice %188 {offsets = [0, 0], sizes = [8, 32], strides = [1, 1]} : vector<8x128xf32> to vector<8x32xf32>
    %190 = vector.extract_strided_slice %188 {offsets = [0, 32], sizes = [8, 32], strides = [1, 1]} : vector<8x128xf32> to vector<8x32xf32>
    %191 = vector.extract_strided_slice %184 {offsets = [0, 64], sizes = [8, 32], strides = [1, 1]} : vector<8x128xf32> to vector<8x32xf32>
    %192 = vector.extract_strided_slice %188 {offsets = [0, 96], sizes = [8, 32], strides = [1, 1]} : vector<8x128xf32> to vector<8x32xf32>
    %193 = arith.mulf %190, %181 : vector<8x32xf32>
    %194 = arith.mulf %189, %191 : vector<8x32xf32>
    %195 = arith.addf %193, %194 : vector<8x32xf32>
    %196 = math.tanh %195 : vector<8x32xf32>
    %197 = arith.mulf %192, %196 : vector<8x32xf32>
    %cst_61 = arith.constant dense<0.000000e+00> : vector<8x128xf32>
    %198 = tpu.matmul %197, %177, %cst_61 {dimension_numbers = #tpu.dot_dimension_numbers<[1], [0], [0], [1], [0, 0, 1, 1], [], []>} : vector<8x32xf32>, vector<32x128xf32>, vector<8x128xf32> -> vector<8x128xf32>
    %199 = vector.broadcast %179 : vector<1x128xf32> to vector<8x128xf32>
    %200 = arith.addf %198, %199 : vector<8x128xf32>
    %cst_62 = arith.constant dense<0.000000e+00> : vector<8x128xf32>
    %201 = tpu.matmul %197, %175, %cst_62 {dimension_numbers = #tpu.dot_dimension_numbers<[1], [0], [0], [1], [0, 0, 1, 1], [], []>} : vector<8x32xf32>, vector<32x128xf32>, vector<8x128xf32> -> vector<8x128xf32>
    %202 = arith.addf %59, %201 : vector<8x128xf32>
    %203 = math.tanh %202 : vector<8x128xf32>
    %cst_63 = arith.constant 5.000000e-01 : f32
    %204 = vector.broadcast %cst_63 : f32 to vector<8x128xf32>
    %205 = arith.mulf %204, %203 : vector<8x128xf32>
    %cst_64 = arith.constant 5.000000e-01 : f32
    %206 = vector.broadcast %cst_64 : f32 to vector<8x128xf32>
    %207 = arith.addf %205, %206 : vector<8x128xf32>
    %208 = vector.extract_strided_slice %207 {offsets = [0, 0], sizes = [8, 32], strides = [1, 1]} : vector<8x128xf32> to vector<8x32xf32>
    %209 = vector.extract_strided_slice %207 {offsets = [0, 32], sizes = [8, 32], strides = [1, 1]} : vector<8x128xf32> to vector<8x32xf32>
    %210 = vector.extract_strided_slice %203 {offsets = [0, 64], sizes = [8, 32], strides = [1, 1]} : vector<8x128xf32> to vector<8x32xf32>
    %211 = vector.extract_strided_slice %207 {offsets = [0, 96], sizes = [8, 32], strides = [1, 1]} : vector<8x128xf32> to vector<8x32xf32>
    %212 = arith.mulf %209, %195 : vector<8x32xf32>
    %213 = arith.mulf %208, %210 : vector<8x32xf32>
    %214 = arith.addf %212, %213 : vector<8x32xf32>
    %215 = math.tanh %214 : vector<8x32xf32>
    %216 = arith.mulf %211, %215 : vector<8x32xf32>
    %cst_65 = arith.constant dense<0.000000e+00> : vector<8x128xf32>
    %217 = tpu.matmul %216, %177, %cst_65 {dimension_numbers = #tpu.dot_dimension_numbers<[1], [0], [0], [1], [0, 0, 1, 1], [], []>} : vector<8x32xf32>, vector<32x128xf32>, vector<8x128xf32> -> vector<8x128xf32>
    %218 = vector.broadcast %179 : vector<1x128xf32> to vector<8x128xf32>
    %219 = arith.addf %217, %218 : vector<8x128xf32>
    %cst_66 = arith.constant dense<0.000000e+00> : vector<8x128xf32>
    %220 = tpu.matmul %216, %175, %cst_66 {dimension_numbers = #tpu.dot_dimension_numbers<[1], [0], [0], [1], [0, 0, 1, 1], [], []>} : vector<8x32xf32>, vector<32x128xf32>, vector<8x128xf32> -> vector<8x128xf32>
    %221 = arith.addf %78, %220 : vector<8x128xf32>
    %222 = math.tanh %221 : vector<8x128xf32>
    %cst_67 = arith.constant 5.000000e-01 : f32
    %223 = vector.broadcast %cst_67 : f32 to vector<8x128xf32>
    %224 = arith.mulf %223, %222 : vector<8x128xf32>
    %cst_68 = arith.constant 5.000000e-01 : f32
    %225 = vector.broadcast %cst_68 : f32 to vector<8x128xf32>
    %226 = arith.addf %224, %225 : vector<8x128xf32>
    %227 = vector.extract_strided_slice %226 {offsets = [0, 0], sizes = [8, 32], strides = [1, 1]} : vector<8x128xf32> to vector<8x32xf32>
    %228 = vector.extract_strided_slice %226 {offsets = [0, 32], sizes = [8, 32], strides = [1, 1]} : vector<8x128xf32> to vector<8x32xf32>
    %229 = vector.extract_strided_slice %222 {offsets = [0, 64], sizes = [8, 32], strides = [1, 1]} : vector<8x128xf32> to vector<8x32xf32>
    %230 = vector.extract_strided_slice %226 {offsets = [0, 96], sizes = [8, 32], strides = [1, 1]} : vector<8x128xf32> to vector<8x32xf32>
    %231 = arith.mulf %228, %214 : vector<8x32xf32>
    %232 = arith.mulf %227, %229 : vector<8x32xf32>
    %233 = arith.addf %231, %232 : vector<8x32xf32>
    %234 = math.tanh %233 : vector<8x32xf32>
    %235 = arith.mulf %230, %234 : vector<8x32xf32>
    %cst_69 = arith.constant dense<0.000000e+00> : vector<8x128xf32>
    %236 = tpu.matmul %235, %177, %cst_69 {dimension_numbers = #tpu.dot_dimension_numbers<[1], [0], [0], [1], [0, 0, 1, 1], [], []>} : vector<8x32xf32>, vector<32x128xf32>, vector<8x128xf32> -> vector<8x128xf32>
    %237 = vector.broadcast %179 : vector<1x128xf32> to vector<8x128xf32>
    %238 = arith.addf %236, %237 : vector<8x128xf32>
    %cst_70 = arith.constant dense<0.000000e+00> : vector<8x128xf32>
    %239 = tpu.matmul %235, %175, %cst_70 {dimension_numbers = #tpu.dot_dimension_numbers<[1], [0], [0], [1], [0, 0, 1, 1], [], []>} : vector<8x32xf32>, vector<32x128xf32>, vector<8x128xf32> -> vector<8x128xf32>
    %240 = arith.addf %97, %239 : vector<8x128xf32>
    %241 = math.tanh %240 : vector<8x128xf32>
    %cst_71 = arith.constant 5.000000e-01 : f32
    %242 = vector.broadcast %cst_71 : f32 to vector<8x128xf32>
    %243 = arith.mulf %242, %241 : vector<8x128xf32>
    %cst_72 = arith.constant 5.000000e-01 : f32
    %244 = vector.broadcast %cst_72 : f32 to vector<8x128xf32>
    %245 = arith.addf %243, %244 : vector<8x128xf32>
    %246 = vector.extract_strided_slice %245 {offsets = [0, 0], sizes = [8, 32], strides = [1, 1]} : vector<8x128xf32> to vector<8x32xf32>
    %247 = vector.extract_strided_slice %245 {offsets = [0, 32], sizes = [8, 32], strides = [1, 1]} : vector<8x128xf32> to vector<8x32xf32>
    %248 = vector.extract_strided_slice %241 {offsets = [0, 64], sizes = [8, 32], strides = [1, 1]} : vector<8x128xf32> to vector<8x32xf32>
    %249 = vector.extract_strided_slice %245 {offsets = [0, 96], sizes = [8, 32], strides = [1, 1]} : vector<8x128xf32> to vector<8x32xf32>
    %250 = arith.mulf %247, %233 : vector<8x32xf32>
    %251 = arith.mulf %246, %248 : vector<8x32xf32>
    %252 = arith.addf %250, %251 : vector<8x32xf32>
    %253 = math.tanh %252 : vector<8x32xf32>
    %254 = arith.mulf %249, %253 : vector<8x32xf32>
    %cst_73 = arith.constant dense<0.000000e+00> : vector<8x128xf32>
    %255 = tpu.matmul %254, %177, %cst_73 {dimension_numbers = #tpu.dot_dimension_numbers<[1], [0], [0], [1], [0, 0, 1, 1], [], []>} : vector<8x32xf32>, vector<32x128xf32>, vector<8x128xf32> -> vector<8x128xf32>
    %256 = vector.broadcast %179 : vector<1x128xf32> to vector<8x128xf32>
    %257 = arith.addf %255, %256 : vector<8x128xf32>
    %cst_74 = arith.constant dense<0.000000e+00> : vector<8x128xf32>
    %258 = tpu.matmul %254, %175, %cst_74 {dimension_numbers = #tpu.dot_dimension_numbers<[1], [0], [0], [1], [0, 0, 1, 1], [], []>} : vector<8x32xf32>, vector<32x128xf32>, vector<8x128xf32> -> vector<8x128xf32>
    %259 = arith.addf %116, %258 : vector<8x128xf32>
    %260 = math.tanh %259 : vector<8x128xf32>
    %cst_75 = arith.constant 5.000000e-01 : f32
    %261 = vector.broadcast %cst_75 : f32 to vector<8x128xf32>
    %262 = arith.mulf %261, %260 : vector<8x128xf32>
    %cst_76 = arith.constant 5.000000e-01 : f32
    %263 = vector.broadcast %cst_76 : f32 to vector<8x128xf32>
    %264 = arith.addf %262, %263 : vector<8x128xf32>
    %265 = vector.extract_strided_slice %264 {offsets = [0, 0], sizes = [8, 32], strides = [1, 1]} : vector<8x128xf32> to vector<8x32xf32>
    %266 = vector.extract_strided_slice %264 {offsets = [0, 32], sizes = [8, 32], strides = [1, 1]} : vector<8x128xf32> to vector<8x32xf32>
    %267 = vector.extract_strided_slice %260 {offsets = [0, 64], sizes = [8, 32], strides = [1, 1]} : vector<8x128xf32> to vector<8x32xf32>
    %268 = vector.extract_strided_slice %264 {offsets = [0, 96], sizes = [8, 32], strides = [1, 1]} : vector<8x128xf32> to vector<8x32xf32>
    %269 = arith.mulf %266, %252 : vector<8x32xf32>
    %270 = arith.mulf %265, %267 : vector<8x32xf32>
    %271 = arith.addf %269, %270 : vector<8x32xf32>
    %272 = math.tanh %271 : vector<8x32xf32>
    %273 = arith.mulf %268, %272 : vector<8x32xf32>
    %cst_77 = arith.constant dense<0.000000e+00> : vector<8x128xf32>
    %274 = tpu.matmul %273, %177, %cst_77 {dimension_numbers = #tpu.dot_dimension_numbers<[1], [0], [0], [1], [0, 0, 1, 1], [], []>} : vector<8x32xf32>, vector<32x128xf32>, vector<8x128xf32> -> vector<8x128xf32>
    %275 = vector.broadcast %179 : vector<1x128xf32> to vector<8x128xf32>
    %276 = arith.addf %274, %275 : vector<8x128xf32>
    %cst_78 = arith.constant dense<0.000000e+00> : vector<8x128xf32>
    %277 = tpu.matmul %273, %175, %cst_78 {dimension_numbers = #tpu.dot_dimension_numbers<[1], [0], [0], [1], [0, 0, 1, 1], [], []>} : vector<8x32xf32>, vector<32x128xf32>, vector<8x128xf32> -> vector<8x128xf32>
    %278 = arith.addf %135, %277 : vector<8x128xf32>
    %279 = math.tanh %278 : vector<8x128xf32>
    %cst_79 = arith.constant 5.000000e-01 : f32
    %280 = vector.broadcast %cst_79 : f32 to vector<8x128xf32>
    %281 = arith.mulf %280, %279 : vector<8x128xf32>
    %cst_80 = arith.constant 5.000000e-01 : f32
    %282 = vector.broadcast %cst_80 : f32 to vector<8x128xf32>
    %283 = arith.addf %281, %282 : vector<8x128xf32>
    %284 = vector.extract_strided_slice %283 {offsets = [0, 0], sizes = [8, 32], strides = [1, 1]} : vector<8x128xf32> to vector<8x32xf32>
    %285 = vector.extract_strided_slice %283 {offsets = [0, 32], sizes = [8, 32], strides = [1, 1]} : vector<8x128xf32> to vector<8x32xf32>
    %286 = vector.extract_strided_slice %279 {offsets = [0, 64], sizes = [8, 32], strides = [1, 1]} : vector<8x128xf32> to vector<8x32xf32>
    %287 = vector.extract_strided_slice %283 {offsets = [0, 96], sizes = [8, 32], strides = [1, 1]} : vector<8x128xf32> to vector<8x32xf32>
    %288 = arith.mulf %285, %271 : vector<8x32xf32>
    %289 = arith.mulf %284, %286 : vector<8x32xf32>
    %290 = arith.addf %288, %289 : vector<8x32xf32>
    %291 = math.tanh %290 : vector<8x32xf32>
    %292 = arith.mulf %287, %291 : vector<8x32xf32>
    %cst_81 = arith.constant dense<0.000000e+00> : vector<8x128xf32>
    %293 = tpu.matmul %292, %177, %cst_81 {dimension_numbers = #tpu.dot_dimension_numbers<[1], [0], [0], [1], [0, 0, 1, 1], [], []>} : vector<8x32xf32>, vector<32x128xf32>, vector<8x128xf32> -> vector<8x128xf32>
    %294 = vector.broadcast %179 : vector<1x128xf32> to vector<8x128xf32>
    %295 = arith.addf %293, %294 : vector<8x128xf32>
    %cst_82 = arith.constant dense<0.000000e+00> : vector<8x128xf32>
    %296 = tpu.matmul %292, %175, %cst_82 {dimension_numbers = #tpu.dot_dimension_numbers<[1], [0], [0], [1], [0, 0, 1, 1], [], []>} : vector<8x32xf32>, vector<32x128xf32>, vector<8x128xf32> -> vector<8x128xf32>
    %297 = arith.addf %154, %296 : vector<8x128xf32>
    %298 = math.tanh %297 : vector<8x128xf32>
    %cst_83 = arith.constant 5.000000e-01 : f32
    %299 = vector.broadcast %cst_83 : f32 to vector<8x128xf32>
    %300 = arith.mulf %299, %298 : vector<8x128xf32>
    %cst_84 = arith.constant 5.000000e-01 : f32
    %301 = vector.broadcast %cst_84 : f32 to vector<8x128xf32>
    %302 = arith.addf %300, %301 : vector<8x128xf32>
    %303 = vector.extract_strided_slice %302 {offsets = [0, 0], sizes = [8, 32], strides = [1, 1]} : vector<8x128xf32> to vector<8x32xf32>
    %304 = vector.extract_strided_slice %302 {offsets = [0, 32], sizes = [8, 32], strides = [1, 1]} : vector<8x128xf32> to vector<8x32xf32>
    %305 = vector.extract_strided_slice %298 {offsets = [0, 64], sizes = [8, 32], strides = [1, 1]} : vector<8x128xf32> to vector<8x32xf32>
    %306 = vector.extract_strided_slice %302 {offsets = [0, 96], sizes = [8, 32], strides = [1, 1]} : vector<8x128xf32> to vector<8x32xf32>
    %307 = arith.mulf %304, %290 : vector<8x32xf32>
    %308 = arith.mulf %303, %305 : vector<8x32xf32>
    %309 = arith.addf %307, %308 : vector<8x32xf32>
    %310 = math.tanh %309 : vector<8x32xf32>
    %311 = arith.mulf %306, %310 : vector<8x32xf32>
    %cst_85 = arith.constant dense<0.000000e+00> : vector<8x128xf32>
    %312 = tpu.matmul %311, %177, %cst_85 {dimension_numbers = #tpu.dot_dimension_numbers<[1], [0], [0], [1], [0, 0, 1, 1], [], []>} : vector<8x32xf32>, vector<32x128xf32>, vector<8x128xf32> -> vector<8x128xf32>
    %313 = vector.broadcast %179 : vector<1x128xf32> to vector<8x128xf32>
    %314 = arith.addf %312, %313 : vector<8x128xf32>
    %cst_86 = arith.constant dense<0.000000e+00> : vector<8x128xf32>
    %315 = tpu.matmul %311, %175, %cst_86 {dimension_numbers = #tpu.dot_dimension_numbers<[1], [0], [0], [1], [0, 0, 1, 1], [], []>} : vector<8x32xf32>, vector<32x128xf32>, vector<8x128xf32> -> vector<8x128xf32>
    %316 = arith.addf %173, %315 : vector<8x128xf32>
    %317 = math.tanh %316 : vector<8x128xf32>
    %cst_87 = arith.constant 5.000000e-01 : f32
    %318 = vector.broadcast %cst_87 : f32 to vector<8x128xf32>
    %319 = arith.mulf %318, %317 : vector<8x128xf32>
    %cst_88 = arith.constant 5.000000e-01 : f32
    %320 = vector.broadcast %cst_88 : f32 to vector<8x128xf32>
    %321 = arith.addf %319, %320 : vector<8x128xf32>
    %322 = vector.extract_strided_slice %321 {offsets = [0, 0], sizes = [8, 32], strides = [1, 1]} : vector<8x128xf32> to vector<8x32xf32>
    %323 = vector.extract_strided_slice %321 {offsets = [0, 32], sizes = [8, 32], strides = [1, 1]} : vector<8x128xf32> to vector<8x32xf32>
    %324 = vector.extract_strided_slice %317 {offsets = [0, 64], sizes = [8, 32], strides = [1, 1]} : vector<8x128xf32> to vector<8x32xf32>
    %325 = vector.extract_strided_slice %321 {offsets = [0, 96], sizes = [8, 32], strides = [1, 1]} : vector<8x128xf32> to vector<8x32xf32>
    %326 = arith.mulf %323, %309 : vector<8x32xf32>
    %327 = arith.mulf %322, %324 : vector<8x32xf32>
    %328 = arith.addf %326, %327 : vector<8x32xf32>
    %329 = math.tanh %328 : vector<8x32xf32>
    %330 = arith.mulf %325, %329 : vector<8x32xf32>
    %cst_89 = arith.constant dense<0.000000e+00> : vector<8x128xf32>
    %331 = tpu.matmul %330, %177, %cst_89 {dimension_numbers = #tpu.dot_dimension_numbers<[1], [0], [0], [1], [0, 0, 1, 1], [], []>} : vector<8x32xf32>, vector<32x128xf32>, vector<8x128xf32> -> vector<8x128xf32>
    %332 = vector.broadcast %179 : vector<1x128xf32> to vector<8x128xf32>
    %333 = arith.addf %331, %332 : vector<8x128xf32>
    %c1_90 = arith.constant 1 : index
    %c0_91 = arith.constant 0 : index
    %c0_92 = arith.constant 0 : index
    %334 = vector.load %arg6[%c1_90, %c0_91, %c0_92] : memref<2x32x128xf32, #tpu.memory_space<vmem>>, vector<1x32x128xf32>
    %335 = vector.shape_cast %334 : vector<1x32x128xf32> to vector<32x128xf32>
    %cst_93 = arith.constant 0.000000e+00 : f32
    %336 = vector.broadcast %cst_93 : f32 to vector<8x32xf32>
    %cst_94 = arith.constant 0.000000e+00 : f32
    %337 = vector.broadcast %cst_94 : f32 to vector<8x32xf32>
    %cst_95 = arith.constant dense<0.000000e+00> : vector<8x128xf32>
    %338 = tpu.matmul %336, %335, %cst_95 {dimension_numbers = #tpu.dot_dimension_numbers<[1], [0], [0], [1], [0, 0, 1, 1], [], []>} : vector<8x32xf32>, vector<32x128xf32>, vector<8x128xf32> -> vector<8x128xf32>
    %339 = arith.addf %200, %338 : vector<8x128xf32>
    %340 = math.tanh %339 : vector<8x128xf32>
    %cst_96 = arith.constant 5.000000e-01 : f32
    %341 = vector.broadcast %cst_96 : f32 to vector<8x128xf32>
    %342 = arith.mulf %341, %340 : vector<8x128xf32>
    %cst_97 = arith.constant 5.000000e-01 : f32
    %343 = vector.broadcast %cst_97 : f32 to vector<8x128xf32>
    %344 = arith.addf %342, %343 : vector<8x128xf32>
    %345 = vector.extract_strided_slice %344 {offsets = [0, 0], sizes = [8, 32], strides = [1, 1]} : vector<8x128xf32> to vector<8x32xf32>
    %346 = vector.extract_strided_slice %344 {offsets = [0, 32], sizes = [8, 32], strides = [1, 1]} : vector<8x128xf32> to vector<8x32xf32>
    %347 = vector.extract_strided_slice %340 {offsets = [0, 64], sizes = [8, 32], strides = [1, 1]} : vector<8x128xf32> to vector<8x32xf32>
    %348 = vector.extract_strided_slice %344 {offsets = [0, 96], sizes = [8, 32], strides = [1, 1]} : vector<8x128xf32> to vector<8x32xf32>
    %349 = arith.mulf %346, %337 : vector<8x32xf32>
    %350 = arith.mulf %345, %347 : vector<8x32xf32>
    %351 = arith.addf %349, %350 : vector<8x32xf32>
    %352 = math.tanh %351 : vector<8x32xf32>
    %353 = arith.mulf %348, %352 : vector<8x32xf32>
    %cst_98 = arith.constant dense<0.000000e+00> : vector<8x128xf32>
    %354 = tpu.matmul %353, %335, %cst_98 {dimension_numbers = #tpu.dot_dimension_numbers<[1], [0], [0], [1], [0, 0, 1, 1], [], []>} : vector<8x32xf32>, vector<32x128xf32>, vector<8x128xf32> -> vector<8x128xf32>
    %355 = arith.addf %219, %354 : vector<8x128xf32>
    %356 = math.tanh %355 : vector<8x128xf32>
    %cst_99 = arith.constant 5.000000e-01 : f32
    %357 = vector.broadcast %cst_99 : f32 to vector<8x128xf32>
    %358 = arith.mulf %357, %356 : vector<8x128xf32>
    %cst_100 = arith.constant 5.000000e-01 : f32
    %359 = vector.broadcast %cst_100 : f32 to vector<8x128xf32>
    %360 = arith.addf %358, %359 : vector<8x128xf32>
    %361 = vector.extract_strided_slice %360 {offsets = [0, 0], sizes = [8, 32], strides = [1, 1]} : vector<8x128xf32> to vector<8x32xf32>
    %362 = vector.extract_strided_slice %360 {offsets = [0, 32], sizes = [8, 32], strides = [1, 1]} : vector<8x128xf32> to vector<8x32xf32>
    %363 = vector.extract_strided_slice %356 {offsets = [0, 64], sizes = [8, 32], strides = [1, 1]} : vector<8x128xf32> to vector<8x32xf32>
    %364 = vector.extract_strided_slice %360 {offsets = [0, 96], sizes = [8, 32], strides = [1, 1]} : vector<8x128xf32> to vector<8x32xf32>
    %365 = arith.mulf %362, %351 : vector<8x32xf32>
    %366 = arith.mulf %361, %363 : vector<8x32xf32>
    %367 = arith.addf %365, %366 : vector<8x32xf32>
    %368 = math.tanh %367 : vector<8x32xf32>
    %369 = arith.mulf %364, %368 : vector<8x32xf32>
    %cst_101 = arith.constant dense<0.000000e+00> : vector<8x128xf32>
    %370 = tpu.matmul %369, %335, %cst_101 {dimension_numbers = #tpu.dot_dimension_numbers<[1], [0], [0], [1], [0, 0, 1, 1], [], []>} : vector<8x32xf32>, vector<32x128xf32>, vector<8x128xf32> -> vector<8x128xf32>
    %371 = arith.addf %238, %370 : vector<8x128xf32>
    %372 = math.tanh %371 : vector<8x128xf32>
    %cst_102 = arith.constant 5.000000e-01 : f32
    %373 = vector.broadcast %cst_102 : f32 to vector<8x128xf32>
    %374 = arith.mulf %373, %372 : vector<8x128xf32>
    %cst_103 = arith.constant 5.000000e-01 : f32
    %375 = vector.broadcast %cst_103 : f32 to vector<8x128xf32>
    %376 = arith.addf %374, %375 : vector<8x128xf32>
    %377 = vector.extract_strided_slice %376 {offsets = [0, 0], sizes = [8, 32], strides = [1, 1]} : vector<8x128xf32> to vector<8x32xf32>
    %378 = vector.extract_strided_slice %376 {offsets = [0, 32], sizes = [8, 32], strides = [1, 1]} : vector<8x128xf32> to vector<8x32xf32>
    %379 = vector.extract_strided_slice %372 {offsets = [0, 64], sizes = [8, 32], strides = [1, 1]} : vector<8x128xf32> to vector<8x32xf32>
    %380 = vector.extract_strided_slice %376 {offsets = [0, 96], sizes = [8, 32], strides = [1, 1]} : vector<8x128xf32> to vector<8x32xf32>
    %381 = arith.mulf %378, %367 : vector<8x32xf32>
    %382 = arith.mulf %377, %379 : vector<8x32xf32>
    %383 = arith.addf %381, %382 : vector<8x32xf32>
    %384 = math.tanh %383 : vector<8x32xf32>
    %385 = arith.mulf %380, %384 : vector<8x32xf32>
    %cst_104 = arith.constant dense<0.000000e+00> : vector<8x128xf32>
    %386 = tpu.matmul %385, %335, %cst_104 {dimension_numbers = #tpu.dot_dimension_numbers<[1], [0], [0], [1], [0, 0, 1, 1], [], []>} : vector<8x32xf32>, vector<32x128xf32>, vector<8x128xf32> -> vector<8x128xf32>
    %387 = arith.addf %257, %386 : vector<8x128xf32>
    %388 = math.tanh %387 : vector<8x128xf32>
    %cst_105 = arith.constant 5.000000e-01 : f32
    %389 = vector.broadcast %cst_105 : f32 to vector<8x128xf32>
    %390 = arith.mulf %389, %388 : vector<8x128xf32>
    %cst_106 = arith.constant 5.000000e-01 : f32
    %391 = vector.broadcast %cst_106 : f32 to vector<8x128xf32>
    %392 = arith.addf %390, %391 : vector<8x128xf32>
    %393 = vector.extract_strided_slice %392 {offsets = [0, 0], sizes = [8, 32], strides = [1, 1]} : vector<8x128xf32> to vector<8x32xf32>
    %394 = vector.extract_strided_slice %392 {offsets = [0, 32], sizes = [8, 32], strides = [1, 1]} : vector<8x128xf32> to vector<8x32xf32>
    %395 = vector.extract_strided_slice %388 {offsets = [0, 64], sizes = [8, 32], strides = [1, 1]} : vector<8x128xf32> to vector<8x32xf32>
    %396 = vector.extract_strided_slice %392 {offsets = [0, 96], sizes = [8, 32], strides = [1, 1]} : vector<8x128xf32> to vector<8x32xf32>
    %397 = arith.mulf %394, %383 : vector<8x32xf32>
    %398 = arith.mulf %393, %395 : vector<8x32xf32>
    %399 = arith.addf %397, %398 : vector<8x32xf32>
    %400 = math.tanh %399 : vector<8x32xf32>
    %401 = arith.mulf %396, %400 : vector<8x32xf32>
    %cst_107 = arith.constant dense<0.000000e+00> : vector<8x128xf32>
    %402 = tpu.matmul %401, %335, %cst_107 {dimension_numbers = #tpu.dot_dimension_numbers<[1], [0], [0], [1], [0, 0, 1, 1], [], []>} : vector<8x32xf32>, vector<32x128xf32>, vector<8x128xf32> -> vector<8x128xf32>
    %403 = arith.addf %276, %402 : vector<8x128xf32>
    %404 = math.tanh %403 : vector<8x128xf32>
    %cst_108 = arith.constant 5.000000e-01 : f32
    %405 = vector.broadcast %cst_108 : f32 to vector<8x128xf32>
    %406 = arith.mulf %405, %404 : vector<8x128xf32>
    %cst_109 = arith.constant 5.000000e-01 : f32
    %407 = vector.broadcast %cst_109 : f32 to vector<8x128xf32>
    %408 = arith.addf %406, %407 : vector<8x128xf32>
    %409 = vector.extract_strided_slice %408 {offsets = [0, 0], sizes = [8, 32], strides = [1, 1]} : vector<8x128xf32> to vector<8x32xf32>
    %410 = vector.extract_strided_slice %408 {offsets = [0, 32], sizes = [8, 32], strides = [1, 1]} : vector<8x128xf32> to vector<8x32xf32>
    %411 = vector.extract_strided_slice %404 {offsets = [0, 64], sizes = [8, 32], strides = [1, 1]} : vector<8x128xf32> to vector<8x32xf32>
    %412 = vector.extract_strided_slice %408 {offsets = [0, 96], sizes = [8, 32], strides = [1, 1]} : vector<8x128xf32> to vector<8x32xf32>
    %413 = arith.mulf %410, %399 : vector<8x32xf32>
    %414 = arith.mulf %409, %411 : vector<8x32xf32>
    %415 = arith.addf %413, %414 : vector<8x32xf32>
    %416 = math.tanh %415 : vector<8x32xf32>
    %417 = arith.mulf %412, %416 : vector<8x32xf32>
    %cst_110 = arith.constant dense<0.000000e+00> : vector<8x128xf32>
    %418 = tpu.matmul %417, %335, %cst_110 {dimension_numbers = #tpu.dot_dimension_numbers<[1], [0], [0], [1], [0, 0, 1, 1], [], []>} : vector<8x32xf32>, vector<32x128xf32>, vector<8x128xf32> -> vector<8x128xf32>
    %419 = arith.addf %295, %418 : vector<8x128xf32>
    %420 = math.tanh %419 : vector<8x128xf32>
    %cst_111 = arith.constant 5.000000e-01 : f32
    %421 = vector.broadcast %cst_111 : f32 to vector<8x128xf32>
    %422 = arith.mulf %421, %420 : vector<8x128xf32>
    %cst_112 = arith.constant 5.000000e-01 : f32
    %423 = vector.broadcast %cst_112 : f32 to vector<8x128xf32>
    %424 = arith.addf %422, %423 : vector<8x128xf32>
    %425 = vector.extract_strided_slice %424 {offsets = [0, 0], sizes = [8, 32], strides = [1, 1]} : vector<8x128xf32> to vector<8x32xf32>
    %426 = vector.extract_strided_slice %424 {offsets = [0, 32], sizes = [8, 32], strides = [1, 1]} : vector<8x128xf32> to vector<8x32xf32>
    %427 = vector.extract_strided_slice %420 {offsets = [0, 64], sizes = [8, 32], strides = [1, 1]} : vector<8x128xf32> to vector<8x32xf32>
    %428 = vector.extract_strided_slice %424 {offsets = [0, 96], sizes = [8, 32], strides = [1, 1]} : vector<8x128xf32> to vector<8x32xf32>
    %429 = arith.mulf %426, %415 : vector<8x32xf32>
    %430 = arith.mulf %425, %427 : vector<8x32xf32>
    %431 = arith.addf %429, %430 : vector<8x32xf32>
    %432 = math.tanh %431 : vector<8x32xf32>
    %433 = arith.mulf %428, %432 : vector<8x32xf32>
    %cst_113 = arith.constant dense<0.000000e+00> : vector<8x128xf32>
    %434 = tpu.matmul %433, %335, %cst_113 {dimension_numbers = #tpu.dot_dimension_numbers<[1], [0], [0], [1], [0, 0, 1, 1], [], []>} : vector<8x32xf32>, vector<32x128xf32>, vector<8x128xf32> -> vector<8x128xf32>
    %435 = arith.addf %314, %434 : vector<8x128xf32>
    %436 = math.tanh %435 : vector<8x128xf32>
    %cst_114 = arith.constant 5.000000e-01 : f32
    %437 = vector.broadcast %cst_114 : f32 to vector<8x128xf32>
    %438 = arith.mulf %437, %436 : vector<8x128xf32>
    %cst_115 = arith.constant 5.000000e-01 : f32
    %439 = vector.broadcast %cst_115 : f32 to vector<8x128xf32>
    %440 = arith.addf %438, %439 : vector<8x128xf32>
    %441 = vector.extract_strided_slice %440 {offsets = [0, 0], sizes = [8, 32], strides = [1, 1]} : vector<8x128xf32> to vector<8x32xf32>
    %442 = vector.extract_strided_slice %440 {offsets = [0, 32], sizes = [8, 32], strides = [1, 1]} : vector<8x128xf32> to vector<8x32xf32>
    %443 = vector.extract_strided_slice %436 {offsets = [0, 64], sizes = [8, 32], strides = [1, 1]} : vector<8x128xf32> to vector<8x32xf32>
    %444 = vector.extract_strided_slice %440 {offsets = [0, 96], sizes = [8, 32], strides = [1, 1]} : vector<8x128xf32> to vector<8x32xf32>
    %445 = arith.mulf %442, %431 : vector<8x32xf32>
    %446 = arith.mulf %441, %443 : vector<8x32xf32>
    %447 = arith.addf %445, %446 : vector<8x32xf32>
    %448 = math.tanh %447 : vector<8x32xf32>
    %449 = arith.mulf %444, %448 : vector<8x32xf32>
    %cst_116 = arith.constant dense<0.000000e+00> : vector<8x128xf32>
    %450 = tpu.matmul %449, %335, %cst_116 {dimension_numbers = #tpu.dot_dimension_numbers<[1], [0], [0], [1], [0, 0, 1, 1], [], []>} : vector<8x32xf32>, vector<32x128xf32>, vector<8x128xf32> -> vector<8x128xf32>
    %451 = arith.addf %333, %450 : vector<8x128xf32>
    %452 = math.tanh %451 : vector<8x128xf32>
    %cst_117 = arith.constant 5.000000e-01 : f32
    %453 = vector.broadcast %cst_117 : f32 to vector<8x128xf32>
    %454 = arith.mulf %453, %452 : vector<8x128xf32>
    %cst_118 = arith.constant 5.000000e-01 : f32
    %455 = vector.broadcast %cst_118 : f32 to vector<8x128xf32>
    %456 = arith.addf %454, %455 : vector<8x128xf32>
    %457 = vector.extract_strided_slice %456 {offsets = [0, 0], sizes = [8, 32], strides = [1, 1]} : vector<8x128xf32> to vector<8x32xf32>
    %458 = vector.extract_strided_slice %456 {offsets = [0, 32], sizes = [8, 32], strides = [1, 1]} : vector<8x128xf32> to vector<8x32xf32>
    %459 = vector.extract_strided_slice %452 {offsets = [0, 64], sizes = [8, 32], strides = [1, 1]} : vector<8x128xf32> to vector<8x32xf32>
    %460 = vector.extract_strided_slice %456 {offsets = [0, 96], sizes = [8, 32], strides = [1, 1]} : vector<8x128xf32> to vector<8x32xf32>
    %461 = arith.mulf %458, %447 : vector<8x32xf32>
    %462 = arith.mulf %457, %459 : vector<8x32xf32>
    %463 = arith.addf %461, %462 : vector<8x32xf32>
    %464 = math.tanh %463 : vector<8x32xf32>
    %465 = arith.mulf %460, %464 : vector<8x32xf32>
    %c0_119 = arith.constant 0 : index
    %c0_120 = arith.constant 0 : index
    %466 = vector.load %arg8[%c0_119, %c0_120] : memref<1x32xf32, #tpu.memory_space<vmem>>, vector<1x32xf32>
    %467 = vector.broadcast %466 : vector<1x32xf32> to vector<8x32xf32>
    %468 = arith.mulf %465, %467 : vector<8x32xf32>
    %cst_121 = arith.constant dense<0.000000e+00> : vector<8xf32>
    %469 = vector.multi_reduction <add>, %468, %cst_121 [1] : vector<8x32xf32> to vector<8xf32>
    %470 = vector.shape_cast %469 : vector<8xf32> to vector<8x1xf32>
    %c0_122 = arith.constant 0 : index
    %c0_123 = arith.constant 0 : index
    %471 = memref.load %arg9[%c0_122, %c0_123] : memref<1x1xf32, #tpu.memory_space<smem>>
    %472 = vector.broadcast %471 : f32 to vector<8x1xf32>
    %473 = arith.addf %470, %472 : vector<8x1xf32>
    %c0_124 = arith.constant 0 : index
    %c0_125 = arith.constant 0 : index
    %c0_126 = arith.constant 0 : index
    %474 = vector.load %arg10[%c0_124, %c0_125, %c0_126] : memref<1x8x1xf32, #tpu.memory_space<vmem>>, vector<1x8x1xf32>
    %475 = vector.shape_cast %474 : vector<1x8x1xf32> to vector<8x1xf32>
    %476 = vector.shape_cast %473 : vector<8x1xf32> to vector<1x8x1xf32>
    tpu.vector_store %arg10[%c0_124, %c0_125, %c0_126], %476 {strides = array<i32>} : memref<1x8x1xf32, #tpu.memory_space<vmem>>, vector<1x8x1xf32>,
    return
  }
  func.func @transform_0(%arg0: i32) -> (i32, i32, i32) {
    %c0_i32 = arith.constant 0 : i32
    %c0_i32_0 = arith.constant 0 : i32
    %c0_i32_1 = arith.constant 0 : i32
    return %arg0, %c0_i32, %c0_i32_0 : i32, i32, i32
  }
  func.func @transform_1(%arg0: i32) -> (i32, i32) {
    %c0_i32 = arith.constant 0 : i32
    %c0_i32_0 = arith.constant 0 : i32
    %c0_i32_1 = arith.constant 0 : i32
    return %c0_i32, %c0_i32_0 : i32, i32
  }
  func.func @transform_2(%arg0: i32) -> (i32, i32) {
    %c0_i32 = arith.constant 0 : i32
    %c0_i32_0 = arith.constant 0 : i32
    %c0_i32_1 = arith.constant 0 : i32
    return %c0_i32, %c0_i32_0 : i32, i32
  }
  func.func @transform_3(%arg0: i32) -> (i32, i32) {
    %c0_i32 = arith.constant 0 : i32
    %c0_i32_0 = arith.constant 0 : i32
    %c0_i32_1 = arith.constant 0 : i32
    return %c0_i32, %c0_i32_0 : i32, i32
  }
  func.func @transform_4(%arg0: i32) -> (i32, i32, i32) {
    %c0_i32 = arith.constant 0 : i32
    %c0_i32_0 = arith.constant 0 : i32
    %c0_i32_1 = arith.constant 0 : i32
    %c0_i32_2 = arith.constant 0 : i32
    return %c0_i32, %c0_i32_0, %c0_i32_1 : i32, i32, i32
  }
  func.func @transform_5(%arg0: i32) -> (i32, i32, i32) {
    %c0_i32 = arith.constant 0 : i32
    %c0_i32_0 = arith.constant 0 : i32
    %c0_i32_1 = arith.constant 0 : i32
    %c0_i32_2 = arith.constant 0 : i32
    return %c0_i32, %c0_i32_0, %c0_i32_1 : i32, i32, i32
  }
  func.func @transform_6(%arg0: i32) -> (i32, i32, i32) {
    %c0_i32 = arith.constant 0 : i32
    %c0_i32_0 = arith.constant 0 : i32
    %c0_i32_1 = arith.constant 0 : i32
    %c0_i32_2 = arith.constant 0 : i32
    return %c0_i32, %c0_i32_0, %c0_i32_1 : i32, i32, i32
  }
  func.func @transform_7(%arg0: i32) -> (i32, i32) {
    %c0_i32 = arith.constant 0 : i32
    %c0_i32_0 = arith.constant 0 : i32
    %c0_i32_1 = arith.constant 0 : i32
    return %c0_i32, %c0_i32_0 : i32, i32
  }
  func.func @transform_8(%arg0: i32) -> (i32, i32) {
    %c0_i32 = arith.constant 0 : i32
    %c0_i32_0 = arith.constant 0 : i32
    %c0_i32_1 = arith.constant 0 : i32
    return %c0_i32, %c0_i32_0 : i32, i32
  }
  func.func @transform_9(%arg0: i32) -> (i32, i32, i32) {
    %c0_i32 = arith.constant 0 : i32
    %c0_i32_0 = arith.constant 0 : i32
    %c0_i32_1 = arith.constant 0 : i32
    return %arg0, %c0_i32, %c0_i32_0 : i32, i32, i32
  }
}

</mosaic_0001>

<llo_original>
// kernel: tpu_custom_call.1
$region0: #{tpu_custom_call.1}
  #allocation0 [shape = 'u32[]', space=smem, size = 0x4, offset = 0x4, fixed_abs, tag = 'smem constant byte address 0x4 - core index']
  #allocation1 [shape = 'u32[72,128]{1,0:T(1,128)}', space=vmem, size = 0x9000, scoped, tag = 'internal scratch']
  #allocation2 [shape = 'f32[1,1]{1,0:T(1,128)S(6)}', space=smem, size = 0x200, scoped, tag = 'scoped memory for tpu_custom_call.1']
  %s0 = inlined_call_operand.vmem [shape: f32[1,64,8], index: 0, kind: input, shape index: {}]
  %s1 = inlined_call_operand.vmem [shape: f32[8,128], index: 1, kind: input, shape index: {}]
  %s2 = inlined_call_operand.hbm [shape: f32[32,128], index: 2, kind: input, shape index: {}]
  %s3 = inlined_call_operand.vmem [shape: f32[1,128], index: 3, kind: input, shape index: {}]
  %s4 = inlined_call_operand.vmem [shape: f32[2,32,128], index: 4, kind: input, shape index: {}]
  %s5 = inlined_call_operand.hbm [shape: f32[2,32,128], index: 5, kind: input, shape index: {}]
  %s6 = inlined_call_operand.vmem [shape: f32[2,1,128], index: 6, kind: input, shape index: {}]
  %s7 = inlined_call_operand.vmem [shape: f32[1,32], index: 7, kind: input, shape index: {}]
  %s8 = inlined_call_operand.<no memory space> [shape: f32[1,1], index: 8, kind: input, shape index: {}]
  %s9 = inlined_call_operand.vmem [shape: f32[1,8,1], index: 9, kind: output, shape index: {}]
  %s10 = sld [smem:[#allocation0]]
  $region54: #{tpu_custom_call.1} parent=0
    _
  %s12 = ssub.s32 1, %s10
  %s13 = scalar_select 0, %s12, %s10
  %14 = sst [smem:[#allocation2]] %s8
  $region1: #{tpu_custom_call.1} parent=0
    #allocation3 [shape = 'u8[16384]{0}', space=vmem, size = 0x4000, scoped, tag = 'input window, operand 2, single buffered']
    #allocation4 [shape = 's32[1]{0}', space=sflag, size = 0x4, scoped, tag = 'scoped memory for tpu_custom_call.1']
    #allocation5 [shape = 'u8[32768]{0}', space=vmem, size = 0x8000, scoped, tag = 'input window, operand 5, single buffered']
    #allocation6 [shape = 's32[1]{0}', space=sflag, size = 0x4, scoped, tag = 'scoped memory for tpu_custom_call.1']
    %15 = vsyncpa [#allocation4], 0
    %16 = vsyncpa [#allocation6], 0
    // Predicated region
    $region2: #{tpu_custom_call.1} parent=1 // pred_check
      _
    $region3: #{tpu_custom_call.1} parent=1 // pred_check_branch
      %18 = sbr.rel (0) target = $region5
    $region4: #{tpu_custom_call.1} parent=1 // pred_region
      _
    $region5: #{tpu_custom_call.1} parent=1 // pred_fallthru
      _
    // Predicated region
    $region6: #{tpu_custom_call.1} parent=1 // pred_check
      _
    $region7: #{tpu_custom_call.1} parent=1 // pred_check_branch
      %20 = sbr.rel (0) target = $region9
    $region8: #{tpu_custom_call.1} parent=1 // pred_region
      _
    $region9: #{tpu_custom_call.1} parent=1 // pred_fallthru
      _
    // Predicated region
    $region10: #{tpu_custom_call.1} parent=1 // pred_check
      _
    $region11: #{tpu_custom_call.1} parent=1 // pred_check_branch
      %22 = sbr.rel (0) target = $region13
    $region12: #{tpu_custom_call.1} parent=1 // pred_region
      %24 = vsyncadd [#allocation4], 0
      %s25 = sshll.u32 %s2, 4
      %s26 = int_to_ptr.hbm [resolvable:$true] %s25
      %s27 = sshll.u32 [#allocation3], 4
      %s28 = int_to_ptr.vmem [resolvable:$true] %s27
      %33 = dma.hbm_to_vmem [thread:$0]  %s26, 512, %s28, [#allocation4], 128, 128, 8
    $region13: #{tpu_custom_call.1} parent=1 // pred_fallthru
      _
    // Predicated region
    $region14: #{tpu_custom_call.1} parent=1 // pred_check
      _
    $region15: #{tpu_custom_call.1} parent=1 // pred_check_branch
      %35 = sbr.rel (0) target = $region17
    $region16: #{tpu_custom_call.1} parent=1 // pred_region
      _
    $region17: #{tpu_custom_call.1} parent=1 // pred_fallthru
      _
    // Predicated region
    $region18: #{tpu_custom_call.1} parent=1 // pred_check
      _
    $region19: #{tpu_custom_call.1} parent=1 // pred_check_branch
      %37 = sbr.rel (0) target = $region21
    $region20: #{tpu_custom_call.1} parent=1 // pred_region
      _
    $region21: #{tpu_custom_call.1} parent=1 // pred_fallthru
      _
    // Predicated region
    $region22: #{tpu_custom_call.1} parent=1 // pred_check
      _
    $region23: #{tpu_custom_call.1} parent=1 // pred_check_branch
      %39 = sbr.rel (0) target = $region25
    $region24: #{tpu_custom_call.1} parent=1 // pred_region
      %41 = vsyncadd [#allocation6], 0
      %s42 = sshll.u32 %s5, 4
      %s43 = int_to_ptr.hbm [resolvable:$true] %s42
      %s44 = sshll.u32 [#allocation5], 4
      %s45 = int_to_ptr.vmem [resolvable:$true] %s44
      %50 = dma.hbm_to_vmem [thread:$0]  %s43, 1024, %s45, [#allocation6], 128, 128, 8
    $region25: #{tpu_custom_call.1} parent=1 // pred_fallthru
      _
    // Predicated region
    $region26: #{tpu_custom_call.1} parent=1 // pred_check
      _
    $region27: #{tpu_custom_call.1} parent=1 // pred_check_branch
      %52 = sbr.rel (0) target = $region29
    $region28: #{tpu_custom_call.1} parent=1 // pred_region
      _
    $region29: #{tpu_custom_call.1} parent=1 // pred_fallthru
      _
    // Predicated region
    $region30: #{tpu_custom_call.1} parent=1 // pred_check
      _
    $region31: #{tpu_custom_call.1} parent=1 // pred_check_branch
      %54 = sbr.rel (0) target = $region33
    $region32: #{tpu_custom_call.1} parent=1 // pred_region
      _
    $region33: #{tpu_custom_call.1} parent=1 // pred_fallthru
      _
    // Predicated region
    $region34: #{tpu_custom_call.1} parent=1 // pred_check
      _
    $region35: #{tpu_custom_call.1} parent=1 // pred_check_branch
      %56 = sbr.rel (0) target = $region37
    $region36: #{tpu_custom_call.1} parent=1 // pred_region
      _
    $region37: #{tpu_custom_call.1} parent=1 // pred_fallthru
      _
    // Predicated region
    $region38: #{tpu_custom_call.1} parent=1 // pred_check
      _
    $region39: #{tpu_custom_call.1} parent=1 // pred_check_branch
      %58 = sbr.rel (0) target = $region41
    $region40: #{tpu_custom_call.1} parent=1 // pred_region
      %60 = dma.done [#allocation4], 512
    $region41: #{tpu_custom_call.1} parent=1 // pred_fallthru
      _
    // Predicated region
    $region42: #{tpu_custom_call.1} parent=1 // pred_check
      _
    $region43: #{tpu_custom_call.1} parent=1 // pred_check_branch
      %62 = sbr.rel (0) target = $region45
    $region44: #{tpu_custom_call.1} parent=1 // pred_region
      %64 = dma.done [#allocation6], 1024
    $region45: #{tpu_custom_call.1} parent=1 // pred_fallthru
      _
    %v65 = vld [vmem:[%s0] sm:$0xff]
    %v66 = vld [vmem:[%s0 + $0x8] sm:$0xff]
    %v67 = vld [vmem:[%s0 + $0x10] sm:$0xff]
    %v68 = vld [vmem:[%s0 + $0x18] sm:$0xff]
    %v69 = vld [vmem:[%s0 + $0x20] sm:$0xff]
    %v70 = vld [vmem:[%s0 + $0x28] sm:$0xff]
    %v71 = vld [vmem:[%s0 + $0x30] sm:$0xff]
    %v72 = vld [vmem:[%s0 + $0x38] sm:$0xff]
    %v73 = vld [vmem:[%s1] sm:$0xff]
    %v74 = vld [vmem:[%s3] sm:$0x1]
    %v76 = vperm.slane %v74, 0
    %vm78 = vcmask 64512
    %v80 = vsel %vm78, %v65, 0
    %v83 = vsel %vm78, %v66, 0
    %v86 = vsel %vm78, %v67, 0
    %v89 = vsel %vm78, %v68, 0
    %v92 = vsel %vm78, %v69, 0
    %v95 = vsel %vm78, %v70, 0
    %v98 = vsel %vm78, %v71, 0
    %v101 = vsel %vm78, %v72, 0
    %103 = vmatpush.msra.mxu0 0.0
    %104 = vmatpush.msra.mxu0 0.0
    %105 = vmatpush.msra.mxu0 0.0
    %106 = vmatpush.msra.mxu0 0.0
    %107 = vmatpush.msra.mxu0 0.0
    %108 = vmatpush.msra.mxu0 0.0
    %109 = vmatpush.msra.mxu0 0.0
    %110 = vmatpush.msra.mxu0 0.0
    %111 = vmatpush.msra.mxu0 0.0
    %112 = vmatpush.msra.mxu0 0.0
    %113 = vmatpush.msra.mxu0 0.0
    %114 = vmatpush.msra.mxu0 0.0
    %115 = vmatpush.msra.mxu0 0.0
    %116 = vmatpush.msra.mxu0 0.0
    %117 = vmatpush.msra.mxu0 0.0
    %118 = vmatpush.msra.mxu0 %v73
    %119 = vmatmul.f32.gmra.mxu0 %v80
    %v120 = vpop.f32.mrf.mxu0
    %v121 = vadd.f32 %v76, %v120
    %122 = vmatmul.f32.gmra.mxu0 %v83
    %v123 = vpop.f32.mrf.mxu0
    %v124 = vadd.f32 %v76, %v123
    %125 = vmatmul.f32.gmra.mxu0 %v86
    %v126 = vpop.f32.mrf.mxu0
    %v127 = vadd.f32 %v76, %v126
    %128 = vmatmul.f32.gmra.mxu0 %v89
    %v129 = vpop.f32.mrf.mxu0
    %v130 = vadd.f32 %v76, %v129
    %131 = vmatmul.f32.gmra.mxu0 %v92
    %v132 = vpop.f32.mrf.mxu0
    %v133 = vadd.f32 %v76, %v132
    %134 = vmatmul.f32.gmra.mxu0 %v95
    %v135 = vpop.f32.mrf.mxu0
    %v136 = vadd.f32 %v76, %v135
    %137 = vmatmul.f32.gmra.mxu0 %v98
    %v138 = vpop.f32.mrf.mxu0
    %v139 = vadd.f32 %v76, %v138
    %140 = vmatmul.f32.gmra.mxu0 %v101
    %v141 = vpop.f32.mrf.mxu0
    %v142 = vadd.f32 %v76, %v141
    %143 = vdwg.mxu0
    %v144 = vld [vmem:[#allocation3] sm:$0xff]
    %v145 = vld [vmem:[#allocation3 + $0x8] sm:$0xff]
    %v146 = vld [vmem:[#allocation3 + $0x10] sm:$0xff]
    %v147 = vld [vmem:[#allocation3 + $0x18] sm:$0xff]
    %v148 = vld [vmem:[%s4] sm:$0xff]
    %v149 = vld [vmem:[%s4 + $0x8] sm:$0xff]
    %v150 = vld [vmem:[%s4 + $0x10] sm:$0xff]
    %v151 = vld [vmem:[%s4 + $0x18] sm:$0xff]
    %v152 = vld [vmem:[%s6] sm:$0x1]
    %vm153 = vcmask 261120
    %v155 = vsel %vm153, 0.0, 0
    %157 = vmatpush.msra.mxu0 0.0
    %158 = vmatpush.msra.mxu0 0.0
    %159 = vmatpush.msra.mxu0 0.0
    %160 = vmatpush.msra.mxu0 0.0
    %161 = vmatpush.msra.mxu0 0.0
    %162 = vmatpush.msra.mxu0 0.0
    %163 = vmatpush.msra.mxu0 0.0
    %164 = vmatpush.msra.mxu0 0.0
    %165 = vmatpush.msra.mxu0 0.0
    %166 = vmatpush.msra.mxu0 0.0
    %167 = vmatpush.msra.mxu0 0.0
    %168 = vmatpush.msra.mxu0 0.0
    %169 = vmatpush.msra.mxu0 %v147
    %170 = vmatpush.msra.mxu0 %v146
    %171 = vmatpush.msra.mxu0 %v145
    %172 = vmatpush.msra.mxu0 %v144
    %173 = vmatmul.f32.gmra.mxu0 %v155
    %v174 = vpop.f32.mrf.mxu0
    %v175 = vadd.f32 0.0, %v174
    %176 = vdwg.mxu0
    %v177 = vadd.f32 %v121, %v175
    %v178 = vtanh.pop %v177
    %v179 = vmul.f32 %v178, 0.5
    %v180 = vadd.f32 %v179, 0.5
    %v181 = vmul.f32 %v180, 0.0
    %183 = vrot.lane.b32.xlu0 %v178, 64
    %v184 = vpop.permute.xlu0 %183
    %v186 = vmul.f32 %v180, %v184
    %188 = vrot.lane.b32.xlu0 %v186, 32
    %v189 = vpop.permute.xlu0 %188
    %v191 = vadd.f32 %v181, %v189
    %v192 = vtanh.pop %v191
    %194 = vrot.lane.b32.xlu0 %v192, 64
    %v195 = vpop.permute.xlu0 %194
    %v197 = vmul.f32 %v180, %v195
    %v199 = vperm.slane %v152, 0
    %202 = vrot.lane.b32.xlu0 %v197, 32
    %v203 = vpop.permute.xlu0 %202
    %v204 = vsel %vm153, %v203, 0
    %206 = vmatpush.msra.mxu0 0.0
    %207 = vmatpush.msra.mxu0 0.0
    %208 = vmatpush.msra.mxu0 0.0
    %209 = vmatpush.msra.mxu0 0.0
    %210 = vmatpush.msra.mxu0 0.0
    %211 = vmatpush.msra.mxu0 0.0
    %212 = vmatpush.msra.mxu0 0.0
    %213 = vmatpush.msra.mxu0 0.0
    %214 = vmatpush.msra.mxu0 0.0
    %215 = vmatpush.msra.mxu0 0.0
    %216 = vmatpush.msra.mxu0 0.0
    %217 = vmatpush.msra.mxu0 0.0
    %218 = vmatpush.msra.mxu0 %v151
    %219 = vmatpush.msra.mxu0 %v150
    %220 = vmatpush.msra.mxu0 %v149
    %221 = vmatpush.msra.mxu0 %v148
    %222 = vmatmul.f32.gmra.mxu0 %v204
    %v223 = vpop.f32.mrf.mxu0
    %v224 = vadd.f32 %v199, %v223
    %225 = vdwg.mxu0
    %226 = vmatpush.msra.mxu0 0.0
    %227 = vmatpush.msra.mxu0 0.0
    %228 = vmatpush.msra.mxu0 0.0
    %229 = vmatpush.msra.mxu0 0.0
    %230 = vmatpush.msra.mxu0 0.0
    %231 = vmatpush.msra.mxu0 0.0
    %232 = vmatpush.msra.mxu0 0.0
    %233 = vmatpush.msra.mxu0 0.0
    %234 = vmatpush.msra.mxu0 0.0
    %235 = vmatpush.msra.mxu0 0.0
    %236 = vmatpush.msra.mxu0 0.0
    %237 = vmatpush.msra.mxu0 0.0
    %238 = vmatpush.msra.mxu0 %v147
    %239 = vmatpush.msra.mxu0 %v146
    %240 = vmatpush.msra.mxu0 %v145
    %241 = vmatpush.msra.mxu0 %v144
    %242 = vmatmul.f32.gmra.mxu0 %v204
    %v243 = vpop.f32.mrf.mxu0
    %v244 = vadd.f32 0.0, %v243
    %245 = vdwg.mxu0
    %v246 = vadd.f32 %v124, %v244
    %v247 = vtanh.pop %v246
    %v248 = vmul.f32 %v247, 0.5
    %v249 = vadd.f32 %v248, 0.5
    %v250 = vmul.f32 %v249, %v191
    %252 = vrot.lane.b32.xlu0 %v247, 64
    %v253 = vpop.permute.xlu0 %252
    %v255 = vmul.f32 %v249, %v253
    %257 = vrot.lane.b32.xlu0 %v255, 32
    %v258 = vpop.permute.xlu0 %257
    %v260 = vadd.f32 %v250, %v258
    %v261 = vtanh.pop %v260
    %263 = vrot.lane.b32.xlu0 %v261, 64
    %v264 = vpop.permute.xlu0 %263
    %v266 = vmul.f32 %v249, %v264
    %268 = vrot.lane.b32.xlu0 %v266, 32
    %v269 = vpop.permute.xlu0 %268
    %v270 = vsel %vm153, %v269, 0
    %272 = vmatpush.msra.mxu0 0.0
    %273 = vmatpush.msra.mxu0 0.0
    %274 = vmatpush.msra.mxu0 0.0
    %275 = vmatpush.msra.mxu0 0.0
    %276 = vmatpush.msra.mxu0 0.0
    %277 = vmatpush.msra.mxu0 0.0
    %278 = vmatpush.msra.mxu0 0.0
    %279 = vmatpush.msra.mxu0 0.0
    %280 = vmatpush.msra.mxu0 0.0
    %281 = vmatpush.msra.mxu0 0.0
    %282 = vmatpush.msra.mxu0 0.0
    %283 = vmatpush.msra.mxu0 0.0
    %284 = vmatpush.msra.mxu0 %v151
    %285 = vmatpush.msra.mxu0 %v150
    %286 = vmatpush.msra.mxu0 %v149
    %287 = vmatpush.msra.mxu0 %v148
    %288 = vmatmul.f32.gmra.mxu0 %v270
    %v289 = vpop.f32.mrf.mxu0
    %v290 = vadd.f32 %v199, %v289
    %291 = vdwg.mxu0
    %292 = vmatpush.msra.mxu0 0.0
    %293 = vmatpush.msra.mxu0 0.0
    %294 = vmatpush.msra.mxu0 0.0
    %295 = vmatpush.msra.mxu0 0.0
    %296 = vmatpush.msra.mxu0 0.0
    %297 = vmatpush.msra.mxu0 0.0
    %298 = vmatpush.msra.mxu0 0.0
    %299 = vmatpush.msra.mxu0 0.0
    %300 = vmatpush.msra.mxu0 0.0
    %301 = vmatpush.msra.mxu0 0.0
    %302 = vmatpush.msra.mxu0 0.0
    %303 = vmatpush.msra.mxu0 0.0
    %304 = vmatpush.msra.mxu0 %v147
    %305 = vmatpush.msra.mxu0 %v146
    %306 = vmatpush.msra.mxu0 %v145
    %307 = vmatpush.msra.mxu0 %v144
    %308 = vmatmul.f32.gmra.mxu0 %v270
    %v309 = vpop.f32.mrf.mxu0
    %v310 = vadd.f32 0.0, %v309
    %311 = vdwg.mxu0
    %v312 = vadd.f32 %v127, %v310
    %v313 = vtanh.pop %v312
    %v314 = vmul.f32 %v313, 0.5
    %v315 = vadd.f32 %v314, 0.5
    %v316 = vmul.f32 %v315, %v260
    %318 = vrot.lane.b32.xlu0 %v313, 64
    %v319 = vpop.permute.xlu0 %318
    %v321 = vmul.f32 %v315, %v319
    %323 = vrot.lane.b32.xlu0 %v321, 32
    %v324 = vpop.permute.xlu0 %323
    %v326 = vadd.f32 %v316, %v324
    %v327 = vtanh.pop %v326
    %329 = vrot.lane.b32.xlu0 %v327, 64
    %v330 = vpop.permute.xlu0 %329
    %v332 = vmul.f32 %v315, %v330
    %334 = vrot.lane.b32.xlu0 %v332, 32
    %v335 = vpop.permute.xlu0 %334
    %v336 = vsel %vm153, %v335, 0
    %338 = vmatpush.msra.mxu0 0.0
    %339 = vmatpush.msra.mxu0 0.0
    %340 = vmatpush.msra.mxu0 0.0
    %341 = vmatpush.msra.mxu0 0.0
    %342 = vmatpush.msra.mxu0 0.0
    %343 = vmatpush.msra.mxu0 0.0
    %344 = vmatpush.msra.mxu0 0.0
    %345 = vmatpush.msra.mxu0 0.0
    %346 = vmatpush.msra.mxu0 0.0
    %347 = vmatpush.msra.mxu0 0.0
    %348 = vmatpush.msra.mxu0 0.0
    %349 = vmatpush.msra.mxu0 0.0
    %350 = vmatpush.msra.mxu0 %v151
    %351 = vmatpush.msra.mxu0 %v150
    %352 = vmatpush.msra.mxu0 %v149
    %353 = vmatpush.msra.mxu0 %v148
    %354 = vmatmul.f32.gmra.mxu0 %v336
    %v355 = vpop.f32.mrf.mxu0
    %v356 = vadd.f32 %v199, %v355
    %357 = vdwg.mxu0
    %358 = vmatpush.msra.mxu0 0.0
    %359 = vmatpush.msra.mxu0 0.0
    %360 = vmatpush.msra.mxu0 0.0
    %361 = vmatpush.msra.mxu0 0.0
    %362 = vmatpush.msra.mxu0 0.0
    %363 = vmatpush.msra.mxu0 0.0
    %364 = vmatpush.msra.mxu0 0.0
    %365 = vmatpush.msra.mxu0 0.0
    %366 = vmatpush.msra.mxu0 0.0
    %367 = vmatpush.msra.mxu0 0.0
    %368 = vmatpush.msra.mxu0 0.0
    %369 = vmatpush.msra.mxu0 0.0
    %370 = vmatpush.msra.mxu0 %v147
    %371 = vmatpush.msra.mxu0 %v146
    %372 = vmatpush.msra.mxu0 %v145
    %373 = vmatpush.msra.mxu0 %v144
    %374 = vmatmul.f32.gmra.mxu0 %v336
    %v375 = vpop.f32.mrf.mxu0
    %v376 = vadd.f32 0.0, %v375
    %377 = vdwg.mxu0
    %v378 = vadd.f32 %v130, %v376
    %v379 = vtanh.pop %v378
    %v380 = vmul.f32 %v379, 0.5
    %v381 = vadd.f32 %v380, 0.5
    %v382 = vmul.f32 %v381, %v326
    %384 = vrot.lane.b32.xlu0 %v379, 64
    %v385 = vpop.permute.xlu0 %384
    %v387 = vmul.f32 %v381, %v385
    %389 = vrot.lane.b32.xlu0 %v387, 32
    %v390 = vpop.permute.xlu0 %389
    %v392 = vadd.f32 %v382, %v390
    %v393 = vtanh.pop %v392
    %395 = vrot.lane.b32.xlu0 %v393, 64
    %v396 = vpop.permute.xlu0 %395
    %v398 = vmul.f32 %v381, %v396
    %400 = vrot.lane.b32.xlu0 %v398, 32
    %v401 = vpop.permute.xlu0 %400
    %v402 = vsel %vm153, %v401, 0
    %404 = vmatpush.msra.mxu0 0.0
    %405 = vmatpush.msra.mxu0 0.0
    %406 = vmatpush.msra.mxu0 0.0
    %407 = vmatpush.msra.mxu0 0.0
    %408 = vmatpush.msra.mxu0 0.0
    %409 = vmatpush.msra.mxu0 0.0
    %410 = vmatpush.msra.mxu0 0.0
    %411 = vmatpush.msra.mxu0 0.0
    %412 = vmatpush.msra.mxu0 0.0
    %413 = vmatpush.msra.mxu0 0.0
    %414 = vmatpush.msra.mxu0 0.0
    %415 = vmatpush.msra.mxu0 0.0
    %416 = vmatpush.msra.mxu0 %v151
    %417 = vmatpush.msra.mxu0 %v150
    %418 = vmatpush.msra.mxu0 %v149
    %419 = vmatpush.msra.mxu0 %v148
    %420 = vmatmul.f32.gmra.mxu0 %v402
    %v421 = vpop.f32.mrf.mxu0
    %v422 = vadd.f32 %v199, %v421
    %423 = vdwg.mxu0
    %424 = vmatpush.msra.mxu0 0.0
    %425 = vmatpush.msra.mxu0 0.0
    %426 = vmatpush.msra.mxu0 0.0
    %427 = vmatpush.msra.mxu0 0.0
    %428 = vmatpush.msra.mxu0 0.0
    %429 = vmatpush.msra.mxu0 0.0
    %430 = vmatpush.msra.mxu0 0.0
    %431 = vmatpush.msra.mxu0 0.0
    %432 = vmatpush.msra.mxu0 0.0
    %433 = vmatpush.msra.mxu0 0.0
    %434 = vmatpush.msra.mxu0 0.0
    %435 = vmatpush.msra.mxu0 0.0
    %436 = vmatpush.msra.mxu0 %v147
    %437 = vmatpush.msra.mxu0 %v146
    %438 = vmatpush.msra.mxu0 %v145
    %439 = vmatpush.msra.mxu0 %v144
    %440 = vmatmul.f32.gmra.mxu0 %v402
    %v441 = vpop.f32.mrf.mxu0
    %v442 = vadd.f32 0.0, %v441
    %443 = vdwg.mxu0
    %v444 = vadd.f32 %v133, %v442
    %v445 = vtanh.pop %v444
    %v446 = vmul.f32 %v445, 0.5
    %v447 = vadd.f32 %v446, 0.5
    %v448 = vmul.f32 %v447, %v392
    %450 = vrot.lane.b32.xlu0 %v445, 64
    %v451 = vpop.permute.xlu0 %450
    %v453 = vmul.f32 %v447, %v451
    %455 = vrot.lane.b32.xlu0 %v453, 32
    %v456 = vpop.permute.xlu0 %455
    %v458 = vadd.f32 %v448, %v456
    %v459 = vtanh.pop %v458
    %461 = vrot.lane.b32.xlu0 %v459, 64
    %v462 = vpop.permute.xlu0 %461
    %v464 = vmul.f32 %v447, %v462
    %466 = vrot.lane.b32.xlu0 %v464, 32
    %v467 = vpop.permute.xlu0 %466
    %v468 = vsel %vm153, %v467, 0
    %470 = vmatpush.msra.mxu0 0.0
    %471 = vmatpush.msra.mxu0 0.0
    %472 = vmatpush.msra.mxu0 0.0
    %473 = vmatpush.msra.mxu0 0.0
    %474 = vmatpush.msra.mxu0 0.0
    %475 = vmatpush.msra.mxu0 0.0
    %476 = vmatpush.msra.mxu0 0.0
    %477 = vmatpush.msra.mxu0 0.0
    %478 = vmatpush.msra.mxu0 0.0
    %479 = vmatpush.msra.mxu0 0.0
    %480 = vmatpush.msra.mxu0 0.0
    %481 = vmatpush.msra.mxu0 0.0
    %482 = vmatpush.msra.mxu0 %v151
    %483 = vmatpush.msra.mxu0 %v150
    %484 = vmatpush.msra.mxu0 %v149
    %485 = vmatpush.msra.mxu0 %v148
    %486 = vmatmul.f32.gmra.mxu0 %v468
    %v487 = vpop.f32.mrf.mxu0
    %v488 = vadd.f32 %v199, %v487
    %489 = vdwg.mxu0
    %490 = vmatpush.msra.mxu0 0.0
    %491 = vmatpush.msra.mxu0 0.0
    %492 = vmatpush.msra.mxu0 0.0
    %493 = vmatpush.msra.mxu0 0.0
    %494 = vmatpush.msra.mxu0 0.0
    %495 = vmatpush.msra.mxu0 0.0
    %496 = vmatpush.msra.mxu0 0.0
    %497 = vmatpush.msra.mxu0 0.0
    %498 = vmatpush.msra.mxu0 0.0
    %499 = vmatpush.msra.mxu0 0.0
    %500 = vmatpush.msra.mxu0 0.0
    %501 = vmatpush.msra.mxu0 0.0
    %502 = vmatpush.msra.mxu0 %v147
    %503 = vmatpush.msra.mxu0 %v146
    %504 = vmatpush.msra.mxu0 %v145
    %505 = vmatpush.msra.mxu0 %v144
    %506 = vmatmul.f32.gmra.mxu0 %v468
    %v507 = vpop.f32.mrf.mxu0
    %v508 = vadd.f32 0.0, %v507
    %509 = vdwg.mxu0
    %v510 = vadd.f32 %v136, %v508
    %v511 = vtanh.pop %v510
    %v512 = vmul.f32 %v511, 0.5
    %v513 = vadd.f32 %v512, 0.5
    %v514 = vmul.f32 %v513, %v458
    %516 = vrot.lane.b32.xlu0 %v511, 64
    %v517 = vpop.permute.xlu0 %516
    %v519 = vmul.f32 %v513, %v517
    %521 = vrot.lane.b32.xlu0 %v519, 32
    %v522 = vpop.permute.xlu0 %521
    %v524 = vadd.f32 %v514, %v522
    %v525 = vtanh.pop %v524
    %527 = vrot.lane.b32.xlu0 %v525, 64
    %v528 = vpop.permute.xlu0 %527
    %v530 = vmul.f32 %v513, %v528
    %532 = vrot.lane.b32.xlu0 %v530, 32
    %v533 = vpop.permute.xlu0 %532
    %v534 = vsel %vm153, %v533, 0
    %536 = vmatpush.msra.mxu0 0.0
    %537 = vmatpush.msra.mxu0 0.0
    %538 = vmatpush.msra.mxu0 0.0
    %539 = vmatpush.msra.mxu0 0.0
    %540 = vmatpush.msra.mxu0 0.0
    %541 = vmatpush.msra.mxu0 0.0
    %542 = vmatpush.msra.mxu0 0.0
    %543 = vmatpush.msra.mxu0 0.0
    %544 = vmatpush.msra.mxu0 0.0
    %545 = vmatpush.msra.mxu0 0.0
    %546 = vmatpush.msra.mxu0 0.0
    %547 = vmatpush.msra.mxu0 0.0
    %548 = vmatpush.msra.mxu0 %v151
    %549 = vmatpush.msra.mxu0 %v150
    %550 = vmatpush.msra.mxu0 %v149
    %551 = vmatpush.msra.mxu0 %v148
    %552 = vmatmul.f32.gmra.mxu0 %v534
    %v553 = vpop.f32.mrf.mxu0
    %v554 = vadd.f32 %v199, %v553
    %555 = vdwg.mxu0
    %556 = vmatpush.msra.mxu0 0.0
    %557 = vmatpush.msra.mxu0 0.0
    %558 = vmatpush.msra.mxu0 0.0
    %559 = vmatpush.msra.mxu0 0.0
    %560 = vmatpush.msra.mxu0 0.0
    %561 = vmatpush.msra.mxu0 0.0
    %562 = vmatpush.msra.mxu0 0.0
    %563 = vmatpush.msra.mxu0 0.0
    %564 = vmatpush.msra.mxu0 0.0
    %565 = vmatpush.msra.mxu0 0.0
    %566 = vmatpush.msra.mxu0 0.0
    %567 = vmatpush.msra.mxu0 0.0
    %568 = vmatpush.msra.mxu0 %v147
    %569 = vmatpush.msra.mxu0 %v146
    %570 = vmatpush.msra.mxu0 %v145
    %571 = vmatpush.msra.mxu0 %v144
    %572 = vmatmul.f32.gmra.mxu0 %v534
    %v573 = vpop.f32.mrf.mxu0
    %v574 = vadd.f32 0.0, %v573
    %575 = vdwg.mxu0
    %v576 = vadd.f32 %v139, %v574
    %v577 = vtanh.pop %v576
    %v578 = vmul.f32 %v577, 0.5
    %v579 = vadd.f32 %v578, 0.5
    %v580 = vmul.f32 %v579, %v524
    %582 = vrot.lane.b32.xlu0 %v577, 64
    %v583 = vpop.permute.xlu0 %582
    %v585 = vmul.f32 %v579, %v583
    %587 = vrot.lane.b32.xlu0 %v585, 32
    %v588 = vpop.permute.xlu0 %587
    %v590 = vadd.f32 %v580, %v588
    %v591 = vtanh.pop %v590
    %593 = vrot.lane.b32.xlu0 %v591, 64
    %v594 = vpop.permute.xlu0 %593
    %v596 = vmul.f32 %v579, %v594
    %598 = vrot.lane.b32.xlu0 %v596, 32
    %v599 = vpop.permute.xlu0 %598
    %v600 = vsel %vm153, %v599, 0
    %602 = vmatpush.msra.mxu0 0.0
    %603 = vmatpush.msra.mxu0 0.0
    %604 = vmatpush.msra.mxu0 0.0
    %605 = vmatpush.msra.mxu0 0.0
    %606 = vmatpush.msra.mxu0 0.0
    %607 = vmatpush.msra.mxu0 0.0
    %608 = vmatpush.msra.mxu0 0.0
    %609 = vmatpush.msra.mxu0 0.0
    %610 = vmatpush.msra.mxu0 0.0
    %611 = vmatpush.msra.mxu0 0.0
    %612 = vmatpush.msra.mxu0 0.0
    %613 = vmatpush.msra.mxu0 0.0
    %614 = vmatpush.msra.mxu0 %v151
    %615 = vmatpush.msra.mxu0 %v150
    %616 = vmatpush.msra.mxu0 %v149
    %617 = vmatpush.msra.mxu0 %v148
    %618 = vmatmul.f32.gmra.mxu0 %v600
    %v619 = vpop.f32.mrf.mxu0
    %v620 = vadd.f32 %v199, %v619
    %621 = vdwg.mxu0
    %622 = vmatpush.msra.mxu0 0.0
    %623 = vmatpush.msra.mxu0 0.0
    %624 = vmatpush.msra.mxu0 0.0
    %625 = vmatpush.msra.mxu0 0.0
    %626 = vmatpush.msra.mxu0 0.0
    %627 = vmatpush.msra.mxu0 0.0
    %628 = vmatpush.msra.mxu0 0.0
    %629 = vmatpush.msra.mxu0 0.0
    %630 = vmatpush.msra.mxu0 0.0
    %631 = vmatpush.msra.mxu0 0.0
    %632 = vmatpush.msra.mxu0 0.0
    %633 = vmatpush.msra.mxu0 0.0
    %634 = vmatpush.msra.mxu0 %v147
    %635 = vmatpush.msra.mxu0 %v146
    %636 = vmatpush.msra.mxu0 %v145
    %637 = vmatpush.msra.mxu0 %v144
    %638 = vmatmul.f32.gmra.mxu0 %v600
    %v639 = vpop.f32.mrf.mxu0
    %v640 = vadd.f32 0.0, %v639
    %641 = vdwg.mxu0
    %v642 = vadd.f32 %v142, %v640
    %v643 = vtanh.pop %v642
    %v644 = vmul.f32 %v643, 0.5
    %v645 = vadd.f32 %v644, 0.5
    %v646 = vmul.f32 %v645, %v590
    %648 = vrot.lane.b32.xlu0 %v643, 64
    %v649 = vpop.permute.xlu0 %648
    %v651 = vmul.f32 %v645, %v649
    %653 = vrot.lane.b32.xlu0 %v651, 32
    %v654 = vpop.permute.xlu0 %653
    %v656 = vadd.f32 %v646, %v654
    %v657 = vtanh.pop %v656
    %659 = vrot.lane.b32.xlu0 %v657, 64
    %v660 = vpop.permute.xlu0 %659
    %v662 = vmul.f32 %v645, %v660
    %664 = vrot.lane.b32.xlu0 %v662, 32
    %v665 = vpop.permute.xlu0 %664
    %v666 = vsel %vm153, %v665, 0
    %668 = vmatpush.msra.mxu0 0.0
    %669 = vmatpush.msra.mxu0 0.0
    %670 = vmatpush.msra.mxu0 0.0
    %671 = vmatpush.msra.mxu0 0.0
    %672 = vmatpush.msra.mxu0 0.0
    %673 = vmatpush.msra.mxu0 0.0
    %674 = vmatpush.msra.mxu0 0.0
    %675 = vmatpush.msra.mxu0 0.0
    %676 = vmatpush.msra.mxu0 0.0
    %677 = vmatpush.msra.mxu0 0.0
    %678 = vmatpush.msra.mxu0 0.0
    %679 = vmatpush.msra.mxu0 0.0
    %680 = vmatpush.msra.mxu0 %v151
    %681 = vmatpush.msra.mxu0 %v150
    %682 = vmatpush.msra.mxu0 %v149
    %683 = vmatpush.msra.mxu0 %v148
    %684 = vmatmul.f32.gmra.mxu0 %v666
    %v685 = vpop.f32.mrf.mxu0
    %v686 = vadd.f32 %v199, %v685
    %687 = vdwg.mxu0
    %v688 = vld [vmem:[#allocation5] sm:$0xff]
    %v689 = vld [vmem:[#allocation5 + $0x8] sm:$0xff]
    %v690 = vld [vmem:[#allocation5 + $0x10] sm:$0xff]
    %v691 = vld [vmem:[#allocation5 + $0x18] sm:$0xff]
    %s692 = scalar_lea.vmem %s4, 32
    %v693 = vld [vmem:[%s692] sm:$0xff]
    %v694 = vld [vmem:[%s692 + $0x8] sm:$0xff]
    %v695 = vld [vmem:[%s692 + $0x10] sm:$0xff]
    %v696 = vld [vmem:[%s692 + $0x18] sm:$0xff]
    %s697 = scalar_lea.vmem %s6, 1
    %v698 = vld [vmem:[%s697] sm:$0x1]
    %699 = vmatpush.msra.mxu0 0.0
    %700 = vmatpush.msra.mxu0 0.0
    %701 = vmatpush.msra.mxu0 0.0
    %702 = vmatpush.msra.mxu0 0.0
    %703 = vmatpush.msra.mxu0 0.0
    %704 = vmatpush.msra.mxu0 0.0
    %705 = vmatpush.msra.mxu0 0.0
    %706 = vmatpush.msra.mxu0 0.0
    %707 = vmatpush.msra.mxu0 0.0
    %708 = vmatpush.msra.mxu0 0.0
    %709 = vmatpush.msra.mxu0 0.0
    %710 = vmatpush.msra.mxu0 0.0
    %711 = vmatpush.msra.mxu0 %v691
    %712 = vmatpush.msra.mxu0 %v690
    %713 = vmatpush.msra.mxu0 %v689
    %714 = vmatpush.msra.mxu0 %v688
    %715 = vmatmul.f32.gmra.mxu0 %v155
    %v716 = vpop.f32.mrf.mxu0
    %v717 = vadd.f32 0.0, %v716
    %718 = vdwg.mxu0
    %v719 = vadd.f32 %v224, %v717
    %v720 = vtanh.pop %v719
    %v721 = vmul.f32 %v720, 0.5
    %v722 = vadd.f32 %v721, 0.5
    %v723 = vmul.f32 %v722, 0.0
    %725 = vrot.lane.b32.xlu0 %v720, 64
    %v726 = vpop.permute.xlu0 %725
    %v728 = vmul.f32 %v722, %v726
    %730 = vrot.lane.b32.xlu0 %v728, 32
    %v731 = vpop.permute.xlu0 %730
    %v733 = vadd.f32 %v723, %v731
    %v734 = vtanh.pop %v733
    %736 = vrot.lane.b32.xlu0 %v734, 64
    %v737 = vpop.permute.xlu0 %736
    %v739 = vmul.f32 %v722, %v737
    %v741 = vperm.slane %v698, 0
    %744 = vrot.lane.b32.xlu0 %v739, 32
    %v745 = vpop.permute.xlu0 %744
    %v746 = vsel %vm153, %v745, 0
    %748 = vmatpush.msra.mxu0 0.0
    %749 = vmatpush.msra.mxu0 0.0
    %750 = vmatpush.msra.mxu0 0.0
    %751 = vmatpush.msra.mxu0 0.0
    %752 = vmatpush.msra.mxu0 0.0
    %753 = vmatpush.msra.mxu0 0.0
    %754 = vmatpush.msra.mxu0 0.0
    %755 = vmatpush.msra.mxu0 0.0
    %756 = vmatpush.msra.mxu0 0.0
    %757 = vmatpush.msra.mxu0 0.0
    %758 = vmatpush.msra.mxu0 0.0
    %759 = vmatpush.msra.mxu0 0.0
    %760 = vmatpush.msra.mxu0 %v696
    %761 = vmatpush.msra.mxu0 %v695
    %762 = vmatpush.msra.mxu0 %v694
    %763 = vmatpush.msra.mxu0 %v693
    %764 = vmatmul.f32.gmra.mxu0 %v746
    %v765 = vpop.f32.mrf.mxu0
    %v766 = vadd.f32 %v741, %v765
    %767 = vdwg.mxu0
    %768 = vmatpush.msra.mxu0 0.0
    %769 = vmatpush.msra.mxu0 0.0
    %770 = vmatpush.msra.mxu0 0.0
    %771 = vmatpush.msra.mxu0 0.0
    %772 = vmatpush.msra.mxu0 0.0
    %773 = vmatpush.msra.mxu0 0.0
    %774 = vmatpush.msra.mxu0 0.0
    %775 = vmatpush.msra.mxu0 0.0
    %776 = vmatpush.msra.mxu0 0.0
    %777 = vmatpush.msra.mxu0 0.0
    %778 = vmatpush.msra.mxu0 0.0
    %779 = vmatpush.msra.mxu0 0.0
    %780 = vmatpush.msra.mxu0 %v691
    %781 = vmatpush.msra.mxu0 %v690
    %782 = vmatpush.msra.mxu0 %v689
    %783 = vmatpush.msra.mxu0 %v688
    %784 = vmatmul.f32.gmra.mxu0 %v746
    %v785 = vpop.f32.mrf.mxu0
    %v786 = vadd.f32 0.0, %v785
    %787 = vdwg.mxu0
    %v788 = vadd.f32 %v290, %v786
    %v789 = vtanh.pop %v788
    %v790 = vmul.f32 %v789, 0.5
    %v791 = vadd.f32 %v790, 0.5
    %v792 = vmul.f32 %v791, %v733
    %794 = vrot.lane.b32.xlu0 %v789, 64
    %v795 = vpop.permute.xlu0 %794
    %v797 = vmul.f32 %v791, %v795
    %799 = vrot.lane.b32.xlu0 %v797, 32
    %v800 = vpop.permute.xlu0 %799
    %v802 = vadd.f32 %v792, %v800
    %v803 = vtanh.pop %v802
    %805 = vrot.lane.b32.xlu0 %v803, 64
    %v806 = vpop.permute.xlu0 %805
    %v808 = vmul.f32 %v791, %v806
    %810 = vrot.lane.b32.xlu0 %v808, 32
    %v811 = vpop.permute.xlu0 %810
    %v812 = vsel %vm153, %v811, 0
    %814 = vmatpush.msra.mxu0 0.0
    %815 = vmatpush.msra.mxu0 0.0
    %816 = vmatpush.msra.mxu0 0.0
    %817 = vmatpush.msra.mxu0 0.0
    %818 = vmatpush.msra.mxu0 0.0
    %819 = vmatpush.msra.mxu0 0.0
    %820 = vmatpush.msra.mxu0 0.0
    %821 = vmatpush.msra.mxu0 0.0
    %822 = vmatpush.msra.mxu0 0.0
    %823 = vmatpush.msra.mxu0 0.0
    %824 = vmatpush.msra.mxu0 0.0
    %825 = vmatpush.msra.mxu0 0.0
    %826 = vmatpush.msra.mxu0 %v696
    %827 = vmatpush.msra.mxu0 %v695
    %828 = vmatpush.msra.mxu0 %v694
    %829 = vmatpush.msra.mxu0 %v693
    %830 = vmatmul.f32.gmra.mxu0 %v812
    %v831 = vpop.f32.mrf.mxu0
    %v832 = vadd.f32 %v741, %v831
    %833 = vdwg.mxu0
    %834 = vmatpush.msra.mxu0 0.0
    %835 = vmatpush.msra.mxu0 0.0
    %836 = vmatpush.msra.mxu0 0.0
    %837 = vmatpush.msra.mxu0 0.0
    %838 = vmatpush.msra.mxu0 0.0
    %839 = vmatpush.msra.mxu0 0.0
    %840 = vmatpush.msra.mxu0 0.0
    %841 = vmatpush.msra.mxu0 0.0
    %842 = vmatpush.msra.mxu0 0.0
    %843 = vmatpush.msra.mxu0 0.0
    %844 = vmatpush.msra.mxu0 0.0
    %845 = vmatpush.msra.mxu0 0.0
    %846 = vmatpush.msra.mxu0 %v691
    %847 = vmatpush.msra.mxu0 %v690
    %848 = vmatpush.msra.mxu0 %v689
    %849 = vmatpush.msra.mxu0 %v688
    %850 = vmatmul.f32.gmra.mxu0 %v812
    %v851 = vpop.f32.mrf.mxu0
    %v852 = vadd.f32 0.0, %v851
    %853 = vdwg.mxu0
    %v854 = vadd.f32 %v356, %v852
    %v855 = vtanh.pop %v854
    %v856 = vmul.f32 %v855, 0.5
    %v857 = vadd.f32 %v856, 0.5
    %v858 = vmul.f32 %v857, %v802
    %860 = vrot.lane.b32.xlu0 %v855, 64
    %v861 = vpop.permute.xlu0 %860
    %v863 = vmul.f32 %v857, %v861
    %865 = vrot.lane.b32.xlu0 %v863, 32
    %v866 = vpop.permute.xlu0 %865
    %v868 = vadd.f32 %v858, %v866
    %v869 = vtanh.pop %v868
    %871 = vrot.lane.b32.xlu0 %v869, 64
    %v872 = vpop.permute.xlu0 %871
    %v874 = vmul.f32 %v857, %v872
    %876 = vrot.lane.b32.xlu0 %v874, 32
    %v877 = vpop.permute.xlu0 %876
    %v878 = vsel %vm153, %v877, 0
    %880 = vmatpush.msra.mxu0 0.0
    %881 = vmatpush.msra.mxu0 0.0
    %882 = vmatpush.msra.mxu0 0.0
    %883 = vmatpush.msra.mxu0 0.0
    %884 = vmatpush.msra.mxu0 0.0
    %885 = vmatpush.msra.mxu0 0.0
    %886 = vmatpush.msra.mxu0 0.0
    %887 = vmatpush.msra.mxu0 0.0
    %888 = vmatpush.msra.mxu0 0.0
    %889 = vmatpush.msra.mxu0 0.0
    %890 = vmatpush.msra.mxu0 0.0
    %891 = vmatpush.msra.mxu0 0.0
    %892 = vmatpush.msra.mxu0 %v696
    %893 = vmatpush.msra.mxu0 %v695
    %894 = vmatpush.msra.mxu0 %v694
    %895 = vmatpush.msra.mxu0 %v693
    %896 = vmatmul.f32.gmra.mxu0 %v878
    %v897 = vpop.f32.mrf.mxu0
    %v898 = vadd.f32 %v741, %v897
    %899 = vdwg.mxu0
    %900 = vmatpush.msra.mxu0 0.0
    %901 = vmatpush.msra.mxu0 0.0
    %902 = vmatpush.msra.mxu0 0.0
    %903 = vmatpush.msra.mxu0 0.0
    %904 = vmatpush.msra.mxu0 0.0
    %905 = vmatpush.msra.mxu0 0.0
    %906 = vmatpush.msra.mxu0 0.0
    %907 = vmatpush.msra.mxu0 0.0
    %908 = vmatpush.msra.mxu0 0.0
    %909 = vmatpush.msra.mxu0 0.0
    %910 = vmatpush.msra.mxu0 0.0
    %911 = vmatpush.msra.mxu0 0.0
    %912 = vmatpush.msra.mxu0 %v691
    %913 = vmatpush.msra.mxu0 %v690
    %914 = vmatpush.msra.mxu0 %v689
    %915 = vmatpush.msra.mxu0 %v688
    %916 = vmatmul.f32.gmra.mxu0 %v878
    %v917 = vpop.f32.mrf.mxu0
    %v918 = vadd.f32 0.0, %v917
    %919 = vdwg.mxu0
    %v920 = vadd.f32 %v422, %v918
    %v921 = vtanh.pop %v920
    %v922 = vmul.f32 %v921, 0.5
    %v923 = vadd.f32 %v922, 0.5
    %v924 = vmul.f32 %v923, %v868
    %926 = vrot.lane.b32.xlu0 %v921, 64
    %v927 = vpop.permute.xlu0 %926
    %v929 = vmul.f32 %v923, %v927
    %931 = vrot.lane.b32.xlu0 %v929, 32
    %v932 = vpop.permute.xlu0 %931
    %v934 = vadd.f32 %v924, %v932
    %v935 = vtanh.pop %v934
    %937 = vrot.lane.b32.xlu0 %v935, 64
    %v938 = vpop.permute.xlu0 %937
    %v940 = vmul.f32 %v923, %v938
    %942 = vrot.lane.b32.xlu0 %v940, 32
    %v943 = vpop.permute.xlu0 %942
    %v944 = vsel %vm153, %v943, 0
    %946 = vmatpush.msra.mxu0 0.0
    %947 = vmatpush.msra.mxu0 0.0
    %948 = vmatpush.msra.mxu0 0.0
    %949 = vmatpush.msra.mxu0 0.0
    %950 = vmatpush.msra.mxu0 0.0
    %951 = vmatpush.msra.mxu0 0.0
    %952 = vmatpush.msra.mxu0 0.0
    %953 = vmatpush.msra.mxu0 0.0
    %954 = vmatpush.msra.mxu0 0.0
    %955 = vmatpush.msra.mxu0 0.0
    %956 = vmatpush.msra.mxu0 0.0
    %957 = vmatpush.msra.mxu0 0.0
    %958 = vmatpush.msra.mxu0 %v696
    %959 = vmatpush.msra.mxu0 %v695
    %960 = vmatpush.msra.mxu0 %v694
    %961 = vmatpush.msra.mxu0 %v693
    %962 = vmatmul.f32.gmra.mxu0 %v944
    %v963 = vpop.f32.mrf.mxu0
    %v964 = vadd.f32 %v741, %v963
    %965 = vdwg.mxu0
    %966 = vmatpush.msra.mxu0 0.0
    %967 = vmatpush.msra.mxu0 0.0
    %968 = vmatpush.msra.mxu0 0.0
    %969 = vmatpush.msra.mxu0 0.0
    %970 = vmatpush.msra.mxu0 0.0
    %971 = vmatpush.msra.mxu0 0.0
    %972 = vmatpush.msra.mxu0 0.0
    %973 = vmatpush.msra.mxu0 0.0
    %974 = vmatpush.msra.mxu0 0.0
    %975 = vmatpush.msra.mxu0 0.0
    %976 = vmatpush.msra.mxu0 0.0
    %977 = vmatpush.msra.mxu0 0.0
    %978 = vmatpush.msra.mxu0 %v691
    %979 = vmatpush.msra.mxu0 %v690
    %980 = vmatpush.msra.mxu0 %v689
    %981 = vmatpush.msra.mxu0 %v688
    %982 = vmatmul.f32.gmra.mxu0 %v944
    %v983 = vpop.f32.mrf.mxu0
    %v984 = vadd.f32 0.0, %v983
    %985 = vdwg.mxu0
    %v986 = vadd.f32 %v488, %v984
    %v987 = vtanh.pop %v986
    %v988 = vmul.f32 %v987, 0.5
    %v989 = vadd.f32 %v988, 0.5
    %v990 = vmul.f32 %v989, %v934
    %992 = vrot.lane.b32.xlu0 %v987, 64
    %v993 = vpop.permute.xlu0 %992
    %v995 = vmul.f32 %v989, %v993
    %997 = vrot.lane.b32.xlu0 %v995, 32
    %v998 = vpop.permute.xlu0 %997
    %v1000 = vadd.f32 %v990, %v998
    %v1001 = vtanh.pop %v1000
    %1003 = vrot.lane.b32.xlu0 %v1001, 64
    %v1004 = vpop.permute.xlu0 %1003
    %v1006 = vmul.f32 %v989, %v1004
    %1008 = vrot.lane.b32.xlu0 %v1006, 32
    %v1009 = vpop.permute.xlu0 %1008
    %v1010 = vsel %vm153, %v1009, 0
    %1012 = vmatpush.msra.mxu0 0.0
    %1013 = vmatpush.msra.mxu0 0.0
    %1014 = vmatpush.msra.mxu0 0.0
    %1015 = vmatpush.msra.mxu0 0.0
    %1016 = vmatpush.msra.mxu0 0.0
    %1017 = vmatpush.msra.mxu0 0.0
    %1018 = vmatpush.msra.mxu0 0.0
    %1019 = vmatpush.msra.mxu0 0.0
    %1020 = vmatpush.msra.mxu0 0.0
    %1021 = vmatpush.msra.mxu0 0.0
    %1022 = vmatpush.msra.mxu0 0.0
    %1023 = vmatpush.msra.mxu0 0.0
    %1024 = vmatpush.msra.mxu0 %v696
    %1025 = vmatpush.msra.mxu0 %v695
    %1026 = vmatpush.msra.mxu0 %v694
    %1027 = vmatpush.msra.mxu0 %v693
    %1028 = vmatmul.f32.gmra.mxu0 %v1010
    %v1029 = vpop.f32.mrf.mxu0
    %v1030 = vadd.f32 %v741, %v1029
    %1031 = vdwg.mxu0
    %1032 = vmatpush.msra.mxu0 0.0
    %1033 = vmatpush.msra.mxu0 0.0
    %1034 = vmatpush.msra.mxu0 0.0
    %1035 = vmatpush.msra.mxu0 0.0
    %1036 = vmatpush.msra.mxu0 0.0
    %1037 = vmatpush.msra.mxu0 0.0
    %1038 = vmatpush.msra.mxu0 0.0
    %1039 = vmatpush.msra.mxu0 0.0
    %1040 = vmatpush.msra.mxu0 0.0
    %1041 = vmatpush.msra.mxu0 0.0
    %1042 = vmatpush.msra.mxu0 0.0
    %1043 = vmatpush.msra.mxu0 0.0
    %1044 = vmatpush.msra.mxu0 %v691
    %1045 = vmatpush.msra.mxu0 %v690
    %1046 = vmatpush.msra.mxu0 %v689
    %1047 = vmatpush.msra.mxu0 %v688
    %1048 = vmatmul.f32.gmra.mxu0 %v1010
    %v1049 = vpop.f32.mrf.mxu0
    %v1050 = vadd.f32 0.0, %v1049
    %1051 = vdwg.mxu0
    %v1052 = vadd.f32 %v554, %v1050
    %v1053 = vtanh.pop %v1052
    %v1054 = vmul.f32 %v1053, 0.5
    %v1055 = vadd.f32 %v1054, 0.5
    %v1056 = vmul.f32 %v1055, %v1000
    %1058 = vrot.lane.b32.xlu0 %v1053, 64
    %v1059 = vpop.permute.xlu0 %1058
    %v1061 = vmul.f32 %v1055, %v1059
    %1063 = vrot.lane.b32.xlu0 %v1061, 32
    %v1064 = vpop.permute.xlu0 %1063
    %v1066 = vadd.f32 %v1056, %v1064
    %v1067 = vtanh.pop %v1066
    %1069 = vrot.lane.b32.xlu0 %v1067, 64
    %v1070 = vpop.permute.xlu0 %1069
    %v1072 = vmul.f32 %v1055, %v1070
    %1074 = vrot.lane.b32.xlu0 %v1072, 32
    %v1075 = vpop.permute.xlu0 %1074
    %v1076 = vsel %vm153, %v1075, 0
    %1078 = vmatpush.msra.mxu0 0.0
    %1079 = vmatpush.msra.mxu0 0.0
    %1080 = vmatpush.msra.mxu0 0.0
    %1081 = vmatpush.msra.mxu0 0.0
    %1082 = vmatpush.msra.mxu0 0.0
    %1083 = vmatpush.msra.mxu0 0.0
    %1084 = vmatpush.msra.mxu0 0.0
    %1085 = vmatpush.msra.mxu0 0.0
    %1086 = vmatpush.msra.mxu0 0.0
    %1087 = vmatpush.msra.mxu0 0.0
    %1088 = vmatpush.msra.mxu0 0.0
    %1089 = vmatpush.msra.mxu0 0.0
    %1090 = vmatpush.msra.mxu0 %v696
    %1091 = vmatpush.msra.mxu0 %v695
    %1092 = vmatpush.msra.mxu0 %v694
    %1093 = vmatpush.msra.mxu0 %v693
    %1094 = vmatmul.f32.gmra.mxu0 %v1076
    %v1095 = vpop.f32.mrf.mxu0
    %v1096 = vadd.f32 %v741, %v1095
    %1097 = vdwg.mxu0
    %1098 = vmatpush.msra.mxu0 0.0
    %1099 = vmatpush.msra.mxu0 0.0
    %1100 = vmatpush.msra.mxu0 0.0
    %1101 = vmatpush.msra.mxu0 0.0
    %1102 = vmatpush.msra.mxu0 0.0
    %1103 = vmatpush.msra.mxu0 0.0
    %1104 = vmatpush.msra.mxu0 0.0
    %1105 = vmatpush.msra.mxu0 0.0
    %1106 = vmatpush.msra.mxu0 0.0
    %1107 = vmatpush.msra.mxu0 0.0
    %1108 = vmatpush.msra.mxu0 0.0
    %1109 = vmatpush.msra.mxu0 0.0
    %1110 = vmatpush.msra.mxu0 %v691
    %1111 = vmatpush.msra.mxu0 %v690
    %1112 = vmatpush.msra.mxu0 %v689
    %1113 = vmatpush.msra.mxu0 %v688
    %1114 = vmatmul.f32.gmra.mxu0 %v1076
    %v1115 = vpop.f32.mrf.mxu0
    %v1116 = vadd.f32 0.0, %v1115
    %1117 = vdwg.mxu0
    %v1118 = vadd.f32 %v620, %v1116
    %v1119 = vtanh.pop %v1118
    %v1120 = vmul.f32 %v1119, 0.5
    %v1121 = vadd.f32 %v1120, 0.5
    %v1122 = vmul.f32 %v1121, %v1066
    %1124 = vrot.lane.b32.xlu0 %v1119, 64
    %v1125 = vpop.permute.xlu0 %1124
    %v1127 = vmul.f32 %v1121, %v1125
    %1129 = vrot.lane.b32.xlu0 %v1127, 32
    %v1130 = vpop.permute.xlu0 %1129
    %v1132 = vadd.f32 %v1122, %v1130
    %v1133 = vtanh.pop %v1132
    %1135 = vrot.lane.b32.xlu0 %v1133, 64
    %v1136 = vpop.permute.xlu0 %1135
    %v1138 = vmul.f32 %v1121, %v1136
    %1140 = vrot.lane.b32.xlu0 %v1138, 32
    %v1141 = vpop.permute.xlu0 %1140
    %v1142 = vsel %vm153, %v1141, 0
    %1144 = vmatpush.msra.mxu0 0.0
    %1145 = vmatpush.msra.mxu0 0.0
    %1146 = vmatpush.msra.mxu0 0.0
    %1147 = vmatpush.msra.mxu0 0.0
    %1148 = vmatpush.msra.mxu0 0.0
    %1149 = vmatpush.msra.mxu0 0.0
    %1150 = vmatpush.msra.mxu0 0.0
    %1151 = vmatpush.msra.mxu0 0.0
    %1152 = vmatpush.msra.mxu0 0.0
    %1153 = vmatpush.msra.mxu0 0.0
    %1154 = vmatpush.msra.mxu0 0.0
    %1155 = vmatpush.msra.mxu0 0.0
    %1156 = vmatpush.msra.mxu0 %v696
    %1157 = vmatpush.msra.mxu0 %v695
    %1158 = vmatpush.msra.mxu0 %v694
    %1159 = vmatpush.msra.mxu0 %v693
    %1160 = vmatmul.f32.gmra.mxu0 %v1142
    %v1161 = vpop.f32.mrf.mxu0
    %v1162 = vadd.f32 %v741, %v1161
    %1163 = vdwg.mxu0
    %1164 = vmatpush.msra.mxu0 0.0
    %1165 = vmatpush.msra.mxu0 0.0
    %1166 = vmatpush.msra.mxu0 0.0
    %1167 = vmatpush.msra.mxu0 0.0
    %1168 = vmatpush.msra.mxu0 0.0
    %1169 = vmatpush.msra.mxu0 0.0
    %1170 = vmatpush.msra.mxu0 0.0
    %1171 = vmatpush.msra.mxu0 0.0
    %1172 = vmatpush.msra.mxu0 0.0
    %1173 = vmatpush.msra.mxu0 0.0
    %1174 = vmatpush.msra.mxu0 0.0
    %1175 = vmatpush.msra.mxu0 0.0
    %1176 = vmatpush.msra.mxu0 %v691
    %1177 = vmatpush.msra.mxu0 %v690
    %1178 = vmatpush.msra.mxu0 %v689
    %1179 = vmatpush.msra.mxu0 %v688
    %1180 = vmatmul.f32.gmra.mxu0 %v1142
    %v1181 = vpop.f32.mrf.mxu0
    %v1182 = vadd.f32 0.0, %v1181
    %1183 = vdwg.mxu0
    %v1184 = vadd.f32 %v686, %v1182
    %v1185 = vtanh.pop %v1184
    %v1186 = vmul.f32 %v1185, 0.5
    %v1187 = vadd.f32 %v1186, 0.5
    %v1188 = vmul.f32 %v1187, %v1132
    %1190 = vrot.lane.b32.xlu0 %v1185, 64
    %v1191 = vpop.permute.xlu0 %1190
    %v1193 = vmul.f32 %v1187, %v1191
    %1195 = vrot.lane.b32.xlu0 %v1193, 32
    %v1196 = vpop.permute.xlu0 %1195
    %v1198 = vadd.f32 %v1188, %v1196
    %v1199 = vtanh.pop %v1198
    %1201 = vrot.lane.b32.xlu0 %v1199, 64
    %v1202 = vpop.permute.xlu0 %1201
    %v1204 = vmul.f32 %v1187, %v1202
    %1206 = vrot.lane.b32.xlu0 %v1204, 32
    %v1207 = vpop.permute.xlu0 %1206
    %v1208 = vsel %vm153, %v1207, 0
    %1210 = vmatpush.msra.mxu0 0.0
    %1211 = vmatpush.msra.mxu0 0.0
    %1212 = vmatpush.msra.mxu0 0.0
    %1213 = vmatpush.msra.mxu0 0.0
    %1214 = vmatpush.msra.mxu0 0.0
    %1215 = vmatpush.msra.mxu0 0.0
    %1216 = vmatpush.msra.mxu0 0.0
    %1217 = vmatpush.msra.mxu0 0.0
    %1218 = vmatpush.msra.mxu0 0.0
    %1219 = vmatpush.msra.mxu0 0.0
    %1220 = vmatpush.msra.mxu0 0.0
    %1221 = vmatpush.msra.mxu0 0.0
    %1222 = vmatpush.msra.mxu0 %v696
    %1223 = vmatpush.msra.mxu0 %v695
    %1224 = vmatpush.msra.mxu0 %v694
    %1225 = vmatpush.msra.mxu0 %v693
    %1226 = vmatmul.f32.gmra.mxu0 %v1208
    %v1227 = vpop.f32.mrf.mxu0
    %v1228 = vadd.f32 %v741, %v1227
    %1229 = vdwg.mxu0
    %s1230 = scalar_lea.vmem [#allocation5], 32
    %v1231 = vld [vmem:[%s1230] sm:$0xff]
    %v1232 = vld [vmem:[%s1230 + $0x8] sm:$0xff]
    %v1233 = vld [vmem:[%s1230 + $0x10] sm:$0xff]
    %v1234 = vld [vmem:[%s1230 + $0x18] sm:$0xff]
    %1235 = vmatpush.msra.mxu0 0.0
    %1236 = vmatpush.msra.mxu0 0.0
    %1237 = vmatpush.msra.mxu0 0.0
    %1238 = vmatpush.msra.mxu0 0.0
    %1239 = vmatpush.msra.mxu0 0.0
    %1240 = vmatpush.msra.mxu0 0.0
    %1241 = vmatpush.msra.mxu0 0.0
    %1242 = vmatpush.msra.mxu0 0.0
    %1243 = vmatpush.msra.mxu0 0.0
    %1244 = vmatpush.msra.mxu0 0.0
    %1245 = vmatpush.msra.mxu0 0.0
    %1246 = vmatpush.msra.mxu0 0.0
    %1247 = vmatpush.msra.mxu0 %v1234
    %1248 = vmatpush.msra.mxu0 %v1233
    %1249 = vmatpush.msra.mxu0 %v1232
    %1250 = vmatpush.msra.mxu0 %v1231
    %1251 = vmatmul.f32.gmra.mxu0 %v155
    %v1252 = vpop.f32.mrf.mxu0
    %v1253 = vadd.f32 0.0, %v1252
    %1254 = vdwg.mxu0
    %v1255 = vadd.f32 %v766, %v1253
    %v1256 = vtanh.pop %v1255
    %v1257 = vmul.f32 %v1256, 0.5
    %v1258 = vadd.f32 %v1257, 0.5
    %v1259 = vmul.f32 %v1258, 0.0
    %1261 = vrot.lane.b32.xlu0 %v1256, 64
    %v1262 = vpop.permute.xlu0 %1261
    %v1264 = vmul.f32 %v1258, %v1262
    %1266 = vrot.lane.b32.xlu0 %v1264, 32
    %v1267 = vpop.permute.xlu0 %1266
    %v1269 = vadd.f32 %v1259, %v1267
    %v1270 = vtanh.pop %v1269
    %1272 = vrot.lane.b32.xlu0 %v1270, 64
    %v1273 = vpop.permute.xlu0 %1272
    %v1275 = vmul.f32 %v1258, %v1273
    %1277 = vrot.lane.b32.xlu0 %v1275, 32
    %v1278 = vpop.permute.xlu0 %1277
    %v1279 = vsel %vm153, %v1278, 0
    %1281 = vmatpush.msra.mxu0 0.0
    %1282 = vmatpush.msra.mxu0 0.0
    %1283 = vmatpush.msra.mxu0 0.0
    %1284 = vmatpush.msra.mxu0 0.0
    %1285 = vmatpush.msra.mxu0 0.0
    %1286 = vmatpush.msra.mxu0 0.0
    %1287 = vmatpush.msra.mxu0 0.0
    %1288 = vmatpush.msra.mxu0 0.0
    %1289 = vmatpush.msra.mxu0 0.0
    %1290 = vmatpush.msra.mxu0 0.0
    %1291 = vmatpush.msra.mxu0 0.0
    %1292 = vmatpush.msra.mxu0 0.0
    %1293 = vmatpush.msra.mxu0 %v1234
    %1294 = vmatpush.msra.mxu0 %v1233
    %1295 = vmatpush.msra.mxu0 %v1232
    %1296 = vmatpush.msra.mxu0 %v1231
    %1297 = vmatmul.f32.gmra.mxu0 %v1279
    %v1298 = vpop.f32.mrf.mxu0
    %v1299 = vadd.f32 0.0, %v1298
    %1300 = vdwg.mxu0
    %v1301 = vadd.f32 %v832, %v1299
    %v1302 = vtanh.pop %v1301
    %v1303 = vmul.f32 %v1302, 0.5
    %v1304 = vadd.f32 %v1303, 0.5
    %v1305 = vmul.f32 %v1304, %v1269
    %1307 = vrot.lane.b32.xlu0 %v1302, 64
    %v1308 = vpop.permute.xlu0 %1307
    %v1310 = vmul.f32 %v1304, %v1308
    %1312 = vrot.lane.b32.xlu0 %v1310, 32
    %v1313 = vpop.permute.xlu0 %1312
    %v1315 = vadd.f32 %v1305, %v1313
    %v1316 = vtanh.pop %v1315
    %1318 = vrot.lane.b32.xlu0 %v1316, 64
    %v1319 = vpop.permute.xlu0 %1318
    %v1321 = vmul.f32 %v1304, %v1319
    %1323 = vrot.lane.b32.xlu0 %v1321, 32
    %v1324 = vpop.permute.xlu0 %1323
    %v1325 = vsel %vm153, %v1324, 0
    %1327 = vmatpush.msra.mxu0 0.0
    %1328 = vmatpush.msra.mxu0 0.0
    %1329 = vmatpush.msra.mxu0 0.0
    %1330 = vmatpush.msra.mxu0 0.0
    %1331 = vmatpush.msra.mxu0 0.0
    %1332 = vmatpush.msra.mxu0 0.0
    %1333 = vmatpush.msra.mxu0 0.0
    %1334 = vmatpush.msra.mxu0 0.0
    %1335 = vmatpush.msra.mxu0 0.0
    %1336 = vmatpush.msra.mxu0 0.0
    %1337 = vmatpush.msra.mxu0 0.0
    %1338 = vmatpush.msra.mxu0 0.0
    %1339 = vmatpush.msra.mxu0 %v1234
    %1340 = vmatpush.msra.mxu0 %v1233
    %1341 = vmatpush.msra.mxu0 %v1232
    %1342 = vmatpush.msra.mxu0 %v1231
    %1343 = vmatmul.f32.gmra.mxu0 %v1325
    %v1344 = vpop.f32.mrf.mxu0
    %v1345 = vadd.f32 0.0, %v1344
    %1346 = vdwg.mxu0
    %v1347 = vadd.f32 %v898, %v1345
    %v1348 = vtanh.pop %v1347
    %v1349 = vmul.f32 %v1348, 0.5
    %v1350 = vadd.f32 %v1349, 0.5
    %v1351 = vmul.f32 %v1350, %v1315
    %1353 = vrot.lane.b32.xlu0 %v1348, 64
    %v1354 = vpop.permute.xlu0 %1353
    %v1356 = vmul.f32 %v1350, %v1354
    %1358 = vrot.lane.b32.xlu0 %v1356, 32
    %v1359 = vpop.permute.xlu0 %1358
    %v1361 = vadd.f32 %v1351, %v1359
    %v1362 = vtanh.pop %v1361
    %1364 = vrot.lane.b32.xlu0 %v1362, 64
    %v1365 = vpop.permute.xlu0 %1364
    %v1367 = vmul.f32 %v1350, %v1365
    %1369 = vrot.lane.b32.xlu0 %v1367, 32
    %v1370 = vpop.permute.xlu0 %1369
    %v1371 = vsel %vm153, %v1370, 0
    %1373 = vmatpush.msra.mxu0 0.0
    %1374 = vmatpush.msra.mxu0 0.0
    %1375 = vmatpush.msra.mxu0 0.0
    %1376 = vmatpush.msra.mxu0 0.0
    %1377 = vmatpush.msra.mxu0 0.0
    %1378 = vmatpush.msra.mxu0 0.0
    %1379 = vmatpush.msra.mxu0 0.0
    %1380 = vmatpush.msra.mxu0 0.0
    %1381 = vmatpush.msra.mxu0 0.0
    %1382 = vmatpush.msra.mxu0 0.0
    %1383 = vmatpush.msra.mxu0 0.0
    %1384 = vmatpush.msra.mxu0 0.0
    %1385 = vmatpush.msra.mxu0 %v1234
    %1386 = vmatpush.msra.mxu0 %v1233
    %1387 = vmatpush.msra.mxu0 %v1232
    %1388 = vmatpush.msra.mxu0 %v1231
    %1389 = vmatmul.f32.gmra.mxu0 %v1371
    %v1390 = vpop.f32.mrf.mxu0
    %v1391 = vadd.f32 0.0, %v1390
    %1392 = vdwg.mxu0
    %v1393 = vadd.f32 %v964, %v1391
    %v1394 = vtanh.pop %v1393
    %v1395 = vmul.f32 %v1394, 0.5
    %v1396 = vadd.f32 %v1395, 0.5
    %v1397 = vmul.f32 %v1396, %v1361
    %1399 = vrot.lane.b32.xlu0 %v1394, 64
    %v1400 = vpop.permute.xlu0 %1399
    %v1402 = vmul.f32 %v1396, %v1400
    %1404 = vrot.lane.b32.xlu0 %v1402, 32
    %v1405 = vpop.permute.xlu0 %1404
    %v1407 = vadd.f32 %v1397, %v1405
    %v1408 = vtanh.pop %v1407
    %1410 = vrot.lane.b32.xlu0 %v1408, 64
    %v1411 = vpop.permute.xlu0 %1410
    %v1413 = vmul.f32 %v1396, %v1411
    %1415 = vrot.lane.b32.xlu0 %v1413, 32
    %v1416 = vpop.permute.xlu0 %1415
    %v1417 = vsel %vm153, %v1416, 0
    %1419 = vmatpush.msra.mxu0 0.0
    %1420 = vmatpush.msra.mxu0 0.0
    %1421 = vmatpush.msra.mxu0 0.0
    %1422 = vmatpush.msra.mxu0 0.0
    %1423 = vmatpush.msra.mxu0 0.0
    %1424 = vmatpush.msra.mxu0 0.0
    %1425 = vmatpush.msra.mxu0 0.0
    %1426 = vmatpush.msra.mxu0 0.0
    %1427 = vmatpush.msra.mxu0 0.0
    %1428 = vmatpush.msra.mxu0 0.0
    %1429 = vmatpush.msra.mxu0 0.0
    %1430 = vmatpush.msra.mxu0 0.0
    %1431 = vmatpush.msra.mxu0 %v1234
    %1432 = vmatpush.msra.mxu0 %v1233
    %1433 = vmatpush.msra.mxu0 %v1232
    %1434 = vmatpush.msra.mxu0 %v1231
    %1435 = vmatmul.f32.gmra.mxu0 %v1417
    %v1436 = vpop.f32.mrf.mxu0
    %v1437 = vadd.f32 0.0, %v1436
    %1438 = vdwg.mxu0
    %v1439 = vadd.f32 %v1030, %v1437
    %v1440 = vtanh.pop %v1439
    %v1441 = vmul.f32 %v1440, 0.5
    %v1442 = vadd.f32 %v1441, 0.5
    %v1443 = vmul.f32 %v1442, %v1407
    %1445 = vrot.lane.b32.xlu0 %v1440, 64
    %v1446 = vpop.permute.xlu0 %1445
    %v1448 = vmul.f32 %v1442, %v1446
    %1450 = vrot.lane.b32.xlu0 %v1448, 32
    %v1451 = vpop.permute.xlu0 %1450
    %v1453 = vadd.f32 %v1443, %v1451
    %v1454 = vtanh.pop %v1453
    %1456 = vrot.lane.b32.xlu0 %v1454, 64
    %v1457 = vpop.permute.xlu0 %1456
    %v1459 = vmul.f32 %v1442, %v1457
    %1461 = vrot.lane.b32.xlu0 %v1459, 32
    %v1462 = vpop.permute.xlu0 %1461
    %v1463 = vsel %vm153, %v1462, 0
    %1465 = vmatpush.msra.mxu0 0.0
    %1466 = vmatpush.msra.mxu0 0.0
    %1467 = vmatpush.msra.mxu0 0.0
    %1468 = vmatpush.msra.mxu0 0.0
    %1469 = vmatpush.msra.mxu0 0.0
    %1470 = vmatpush.msra.mxu0 0.0
    %1471 = vmatpush.msra.mxu0 0.0
    %1472 = vmatpush.msra.mxu0 0.0
    %1473 = vmatpush.msra.mxu0 0.0
    %1474 = vmatpush.msra.mxu0 0.0
    %1475 = vmatpush.msra.mxu0 0.0
    %1476 = vmatpush.msra.mxu0 0.0
    %1477 = vmatpush.msra.mxu0 %v1234
    %1478 = vmatpush.msra.mxu0 %v1233
    %1479 = vmatpush.msra.mxu0 %v1232
    %1480 = vmatpush.msra.mxu0 %v1231
    %1481 = vmatmul.f32.gmra.mxu0 %v1463
    %v1482 = vpop.f32.mrf.mxu0
    %v1483 = vadd.f32 0.0, %v1482
    %1484 = vdwg.mxu0
    %v1485 = vadd.f32 %v1096, %v1483
    %v1486 = vtanh.pop %v1485
    %v1487 = vmul.f32 %v1486, 0.5
    %v1488 = vadd.f32 %v1487, 0.5
    %v1489 = vmul.f32 %v1488, %v1453
    %1491 = vrot.lane.b32.xlu0 %v1486, 64
    %v1492 = vpop.permute.xlu0 %1491
    %v1494 = vmul.f32 %v1488, %v1492
    %1496 = vrot.lane.b32.xlu0 %v1494, 32
    %v1497 = vpop.permute.xlu0 %1496
    %v1499 = vadd.f32 %v1489, %v1497
    %v1500 = vtanh.pop %v1499
    %1502 = vrot.lane.b32.xlu0 %v1500, 64
    %v1503 = vpop.permute.xlu0 %1502
    %v1505 = vmul.f32 %v1488, %v1503
    %1507 = vrot.lane.b32.xlu0 %v1505, 32
    %v1508 = vpop.permute.xlu0 %1507
    %v1509 = vsel %vm153, %v1508, 0
    %1511 = vmatpush.msra.mxu0 0.0
    %1512 = vmatpush.msra.mxu0 0.0
    %1513 = vmatpush.msra.mxu0 0.0
    %1514 = vmatpush.msra.mxu0 0.0
    %1515 = vmatpush.msra.mxu0 0.0
    %1516 = vmatpush.msra.mxu0 0.0
    %1517 = vmatpush.msra.mxu0 0.0
    %1518 = vmatpush.msra.mxu0 0.0
    %1519 = vmatpush.msra.mxu0 0.0
    %1520 = vmatpush.msra.mxu0 0.0
    %1521 = vmatpush.msra.mxu0 0.0
    %1522 = vmatpush.msra.mxu0 0.0
    %1523 = vmatpush.msra.mxu0 %v1234
    %1524 = vmatpush.msra.mxu0 %v1233
    %1525 = vmatpush.msra.mxu0 %v1232
    %1526 = vmatpush.msra.mxu0 %v1231
    %1527 = vmatmul.f32.gmra.mxu0 %v1509
    %v1528 = vpop.f32.mrf.mxu0
    %v1529 = vadd.f32 0.0, %v1528
    %1530 = vdwg.mxu0
    %v1531 = vadd.f32 %v1162, %v1529
    %v1532 = vtanh.pop %v1531
    %v1533 = vmul.f32 %v1532, 0.5
    %v1534 = vadd.f32 %v1533, 0.5
    %v1535 = vmul.f32 %v1534, %v1499
    %1537 = vrot.lane.b32.xlu0 %v1532, 64
    %v1538 = vpop.permute.xlu0 %1537
    %v1540 = vmul.f32 %v1534, %v1538
    %1542 = vrot.lane.b32.xlu0 %v1540, 32
    %v1543 = vpop.permute.xlu0 %1542
    %v1545 = vadd.f32 %v1535, %v1543
    %v1546 = vtanh.pop %v1545
    %1548 = vrot.lane.b32.xlu0 %v1546, 64
    %v1549 = vpop.permute.xlu0 %1548
    %v1551 = vmul.f32 %v1534, %v1549
    %1553 = vrot.lane.b32.xlu0 %v1551, 32
    %v1554 = vpop.permute.xlu0 %1553
    %v1555 = vsel %vm153, %v1554, 0
    %1557 = vmatpush.msra.mxu0 0.0
    %1558 = vmatpush.msra.mxu0 0.0
    %1559 = vmatpush.msra.mxu0 0.0
    %1560 = vmatpush.msra.mxu0 0.0
    %1561 = vmatpush.msra.mxu0 0.0
    %1562 = vmatpush.msra.mxu0 0.0
    %1563 = vmatpush.msra.mxu0 0.0
    %1564 = vmatpush.msra.mxu0 0.0
    %1565 = vmatpush.msra.mxu0 0.0
    %1566 = vmatpush.msra.mxu0 0.0
    %1567 = vmatpush.msra.mxu0 0.0
    %1568 = vmatpush.msra.mxu0 0.0
    %1569 = vmatpush.msra.mxu0 %v1234
    %1570 = vmatpush.msra.mxu0 %v1233
    %1571 = vmatpush.msra.mxu0 %v1232
    %1572 = vmatpush.msra.mxu0 %v1231
    %1573 = vmatmul.f32.gmra.mxu0 %v1555
    %v1574 = vpop.f32.mrf.mxu0
    %v1575 = vadd.f32 0.0, %v1574
    %1576 = vdwg.mxu0
    %v1577 = vadd.f32 %v1228, %v1575
    %v1578 = vtanh.pop %v1577
    %v1579 = vmul.f32 %v1578, 0.5
    %v1580 = vadd.f32 %v1579, 0.5
    %v1581 = vmul.f32 %v1580, %v1545
    %1583 = vrot.lane.b32.xlu0 %v1578, 64
    %v1584 = vpop.permute.xlu0 %1583
    %v1586 = vmul.f32 %v1580, %v1584
    %1588 = vrot.lane.b32.xlu0 %v1586, 32
    %v1589 = vpop.permute.xlu0 %1588
    %v1591 = vadd.f32 %v1581, %v1589
    %v1592 = vtanh.pop %v1591
    %1594 = vrot.lane.b32.xlu0 %v1592, 64
    %v1595 = vpop.permute.xlu0 %1594
    %v1597 = vmul.f32 %v1580, %v1595
    %v1598 = vld [vmem:[%s7] sm:$0x1]
    %v1600 = vperm.slane %v1598, 0
    %1601 = vrot.lane.b32.xlu0 %v1600, 96
    %v1602 = vpop.permute.xlu0 %1601
    %v1604 = vmul.f32 %v1597, %v1602
    %1606 = vrot.lane.b32.xlu0 %v1604, 32
    %v1607 = vpop.permute.xlu0 %1606
    %v1609 = vsel %vm153, %v1607, 0.0
    %1610 = vadd.xlane.f32.xlu0 %v1609
    %v1611 = vpop.xlane.xlu0 %1610
    %s1612 = sld [smem:[#allocation2]]
    %v1613 = vstv %s1612
    %v1614 = vadd.f32 %v1611, %v1613
    %vm1615 = vcmask 7168
    %1616 = vst.msk [vmem:[%s9] sm:$0xff] %vm1615, %v1614
    // Predicated region
    $region46: #{tpu_custom_call.1} parent=1 // pred_check
      _
    $region47: #{tpu_custom_call.1} parent=1 // pred_check_branch
      %1618 = sbr.rel (0) target = $region49
    $region48: #{tpu_custom_call.1} parent=1 // pred_region
      _
    $region49: #{tpu_custom_call.1} parent=1 // pred_fallthru
      _
    // Predicated region
    $region50: #{tpu_custom_call.1} parent=1 // pred_check
      _
    $region51: #{tpu_custom_call.1} parent=1 // pred_check_branch
      %1620 = sbr.rel (0) target = $region53
    $region52: #{tpu_custom_call.1} parent=1 // pred_region
      _
    $region53: #{tpu_custom_call.1} parent=1 // pred_fallthru
      _
    %1621 = vsyncpa [#allocation4], 1
    %1622 = vsyncpa [#allocation6], 1

</llo_original>
